<compile_context>
chip_gen: v7x
topology: tpu7x:2x2x1
jax: 0.10.0
libtpu: 0.0.40
codegen_flags: <defaults>
</compile_context>

<pallas_src>
import jax
import jax.numpy as jnp
from jax.experimental import pallas as pl
from jax.experimental.pallas import tpu as pltpu


# ------------------------------ small helpers --------------------------------

def _mod(x, n):
    """Vector mod by a trace-time constant (shift/and for powers of two)."""
    if n & (n - 1) == 0:
        return jnp.bitwise_and(x, n - 1)
    return x % n


def _div(x, n):
    """Vector floor-div by a trace-time constant (shift for powers of two)."""
    if n & (n - 1) == 0:
        return jnp.right_shift(x, n.bit_length() - 1)
    return x // n


def _pick_samples_per_step(n, pdn):
    """Largest divisor of n keeping the lane extent B*Pdn around 128-256."""
    target = max(1, 256 // max(pdn, 1))
    best = 1
    for cand in range(1, n + 1):
        if n % cand == 0 and cand <= target:
            best = cand
    return best


# ------------------------------ Pallas kernel --------------------------------

def _make_kernel(Cin, Cinner, Ho, Wo, B):
    """Fused innermost-UNet-block kernel for B samples (closure over sizes)."""
    Pdn = Ho * Wo            # phase-grid pixels per sample
    L = B * Pdn              # lane extent: samples folded into the lane axis
    PAD = Wo + 1             # covers the worst-case +-(Wo+1) lane shift
    Ppad = L + 2 * PAD
    inv_n = 1.0 / (4.0 * Pdn)

    def kernel(xph_ref, wdn_ref, bdn_ref, wup_ref, bup_ref, out_ref,
               act_ref, hpad_ref):
        # ---- in-kernel 0/1 validity masks (pure lane-index functions) ------
        lane = jax.lax.broadcasted_iota(jnp.int32, (1, L), 1)
        q = _mod(lane, Wo)                   # phase-grid col
        m = _mod(_div(lane, Wo), Ho)         # phase-grid row
        row_ok = {-1: m >= 1, 0: None, 1: m < (Ho - 1)}
        col_ok = {-1: q >= 1, 0: None, 1: q < (Wo - 1)}
        valid = {}
        for dh in (-1, 0, 1):
            for dw in (-1, 0, 1):
                r, c = row_ok[dh], col_ok[dw]
                if r is None:
                    valid[(dh, dw)] = c
                elif c is None:
                    valid[(dh, dw)] = r
                else:
                    valid[(dh, dw)] = jnp.logical_and(r, c)

        # Zero the PAD edge strips of the h staging buffer exactly once
        # (scratch persists across grid steps; the interior is rewritten every
        # step and padded reads are select-masked anyway).
        @pl.when(pl.program_id(0) == 0)
        def _init_pad():
            zeros = jnp.zeros((Cinner, PAD), jnp.bfloat16)
            hpad_ref[:, 0:PAD] = zeros
            hpad_ref[:, PAD + L:Ppad] = zeros

        # ---- down path: LeakyReLU -> Conv2d(k4,s2,p1) as ONE fused dot -----
        xa = xph_ref[...]                                       # (4*Cin, Ppad) f32
        act_ref[...] = jnp.where(xa >= 0.0, xa, 0.2 * xa).astype(jnp.bfloat16)

        pieces = []
        for phase in range(4):                                  # input phase (ph_h, ph_w)
            ph_h, ph_w = phase // 2, phase % 2
            r0 = phase * Cin
            for ah in range(2):
                for aw in range(2):
                    dh, dw = ah - ph_h, aw - ph_w
                    s = dh * Wo + dw
                    src = act_ref[r0:r0 + Cin, PAD + s:PAD + s + L]
                    cond = valid[(dh, dw)]
                    if cond is not None:
                        src = jnp.where(cond, src, jnp.zeros_like(src))
                    pieces.append(src)
        slab = jnp.concatenate(pieces, axis=0)                  # (16*Cin, L) bf16
        h = jnp.dot(wdn_ref[...], slab,
                    preferred_element_type=jnp.float32)         # (Cinner, L) f32
        h = jnp.maximum(h + bdn_ref[...], 0.0)                  # conv bias + ReLU
        hpad_ref[:, PAD:PAD + L] = h.astype(jnp.bfloat16)

        # ---- up path: ConvTranspose2d(k4,s2,p1), one fused dot per phase ---
        ssum = [jnp.zeros((Cin, 1), jnp.float32) for _ in range(B)]
        for pf in range(4):                                     # output phase (pr, pc)
            pr, pc = pf // 2, pf % 2
            taps = []
            for a in range(2):
                for b2 in range(2):
                    dr, dc = pr - 1 + a, pc - 1 + b2
                    s = dr * Wo + dc
                    src = hpad_ref[:, PAD + s:PAD + s + L]      # (Cinner, L) bf16
                    cond = valid[(dr, dc)]
                    if cond is not None:
                        src = jnp.where(cond, src, jnp.zeros_like(src))
                    taps.append(src)
            rhs = jnp.concatenate(taps, axis=0)                 # (4*Cinner, L) bf16
            y = jnp.dot(wup_ref[pf], rhs,
                        preferred_element_type=jnp.float32)     # (Cin, L) f32
            y = y + bup_ref[...]
            # Stream the (unnormalized) phase straight to the output block and
            # copy the skip channels; accumulate per-sample sums.
            out_ref[pf, Cin:2 * Cin, :] = y
            out_ref[pf, 0:Cin, :] = xph_ref[pf * Cin:(pf + 1) * Cin,
                                            PAD:PAD + L]
            for b in range(B):
                ssum[b] = ssum[b] + jnp.sum(
                    y[:, b * Pdn:(b + 1) * Pdn], axis=1, keepdims=True)

        # ---- InstanceNorm2d(Cin): per-(sample, channel) statistics ---------
        mean = [s * inv_n for s in ssum]
        ssq = [jnp.zeros((Cin, 1), jnp.float32) for _ in range(B)]
        for pf in range(4):                          # mean-subtracted 2nd pass
            y = out_ref[pf, Cin:2 * Cin, :]
            for b in range(B):
                d = y[:, b * Pdn:(b + 1) * Pdn] - mean[b]
                ssq[b] = ssq[b] + jnp.sum(d * d, axis=1, keepdims=True)
        inv = [jax.lax.rsqrt(s * inv_n + 1e-5) for s in ssq]

        mean_full = jnp.concatenate(
            [jnp.broadcast_to(mean[b], (Cin, Pdn)) for b in range(B)], axis=1)
        inv_full = jnp.concatenate(
            [jnp.broadcast_to(inv[b], (Cin, Pdn)) for b in range(B)], axis=1)
        for pf in range(4):                          # normalize in place
            y = out_ref[pf, Cin:2 * Cin, :]
            out_ref[pf, Cin:2 * Cin, :] = (y - mean_full) * inv_full

    return kernel


# --------------------------------- wrapper ------------------------------------

def unet_block_innermost(x_nchw, params):
    """Forward of UNetBlock(innermost=True, add_skip_conn=True, norm='instance').

    x_nchw: (N, Cin, H, W) -> (N, 2*Cin, H, W), weights in PyTorch layouts.
    """
    w_dn_t, b_dn, w_up_t, b_up = params
    N, Cin, H, W = x_nchw.shape
    Cinner = w_dn_t.shape[0]
    assert H % 2 == 0 and W % 2 == 0
    Ho, Wo = H // 2, W // 2
    Pdn = Ho * Wo
    B = _pick_samples_per_step(N, Pdn)   # samples folded into the lane axis
    G = N // B
    L = B * Pdn
    PAD = Wo + 1
    Ppad = L + 2 * PAD

    x = x_nchw.astype(jnp.float32)

    # space-to-depth (2x2 phase decomposition), channels-first, samples folded
    # into the lane axis:
    #   xph[g, (pr*2+pc)*Cin + ci, b*Pdn + m*Wo + q] = x[g*B+b, ci, 2m+pr, 2q+pc]
    xr = x.reshape(G, B, Cin, Ho, 2, Wo, 2)
    xph = jnp.transpose(xr, (0, 4, 6, 2, 1, 3, 5)).reshape(G, 4 * Cin, L)
    xph = jnp.pad(xph, ((0, 0), (0, 0), (PAD, PAD)))      # tiny lane pad only

    # Conv2d weight (Cinner, Cin, 4, 4) -> (Cinner, 16*Cin); column blocks are
    # ordered (phase-major, (ah, aw)-minor) to match the in-kernel slab.
    dn_cols = []
    for phase in range(4):
        ph_h, ph_w = phase // 2, phase % 2
        for ah in range(2):
            for aw in range(2):
                dn_cols.append(w_dn_t[:, :, 2 * ah + 1 - ph_h, 2 * aw + 1 - ph_w])
    wdn = jnp.concatenate(dn_cols, axis=1).astype(jnp.bfloat16)   # (Cinner, 16*Cin)

    # ConvTranspose2d weight (Cinner, Cin, 4, 4) -> (4, Cin, 4*Cinner).
    up_blocks = []
    for pf in range(4):
        pr, pc = pf // 2, pf % 2
        cols = []
        for a in range(2):
            for b2 in range(2):
                dr, dc = pr - 1 + a, pc - 1 + b2
                kh, kw = 1 + pr - 2 * dr, 1 + pc - 2 * dc
                cols.append(jnp.transpose(w_up_t[:, :, kh, kw]))  # (Cin, Cinner)
        up_blocks.append(jnp.concatenate(cols, axis=1))           # (Cin, 4*Cinner)
    wup = jnp.stack(up_blocks).astype(jnp.bfloat16)               # (4, Cin, 4*Cinner)

    bdn = b_dn.reshape(Cinner, 1).astype(jnp.float32)
    bup = b_up.reshape(Cin, 1).astype(jnp.float32)

    kernel = _make_kernel(Cin, Cinner, Ho, Wo, B)

    out_ph = pl.pallas_call(
        kernel,
        out_shape=jax.ShapeDtypeStruct((G, 4, 2 * Cin, L), jnp.float32),
        grid=(G,),
        in_specs=[
            pl.BlockSpec((None, 4 * Cin, Ppad), lambda g: (g, 0, 0)),      # xph
            pl.BlockSpec((Cinner, 16 * Cin), lambda g: (0, 0)),            # wdn
            pl.BlockSpec((Cinner, 1), lambda g: (0, 0)),                   # bdn
            pl.BlockSpec((4, Cin, 4 * Cinner), lambda g: (0, 0, 0)),       # wup
            pl.BlockSpec((Cin, 1), lambda g: (0, 0)),                      # bup
        ],
        out_specs=pl.BlockSpec((None, 4, 2 * Cin, L), lambda g: (g, 0, 0, 0)),
        scratch_shapes=[
            pltpu.VMEM((4 * Cin, Ppad), jnp.bfloat16),   # LeakyReLU'd input staging
            pltpu.VMEM((Cinner, Ppad), jnp.bfloat16),    # zero-lane-padded h
        ],
        compiler_params=pltpu.CompilerParams(
            dimension_semantics=("parallel",),
            # <= ~48 MiB keeps headroom on v7x's 64 MiB physical VMEM; raise
            # toward ~96 MiB on v5e/v6e if much larger blocks are used.
            vmem_limit_bytes=48 * 1024 * 1024,
        ),
    )(xph, wdn, bdn, wup, bup)

    # depth-to-space: interleave the 2x2 output phases back to NCHW.
    o = out_ph.reshape(G, 2, 2, 2 * Cin, B, Ho, Wo)     # [g, pr, pc, c, b, m, q]
    o = jnp.transpose(o, (0, 4, 3, 5, 1, 6, 2))         # [g, b, c, m, pr, q, pc]
    return o.reshape(N, 2 * Cin, H, W)


# ------------------------------ pure-JAX reference ----------------------------

def _reference(x, params):
    w_dn, b_dn, w_up, b_up = [p.astype(jnp.float32) for p in params]
    xa = jnp.where(x >= 0.0, x, 0.2 * x)                        # LeakyReLU(0.2)
    h = jax.lax.conv_general_dilated(
        xa, w_dn, window_strides=(2, 2), padding=((1, 1), (1, 1)),
        dimension_numbers=("NCHW", "OIHW", "NCHW"),
        precision=jax.lax.Precision.HIGHEST)
    h = jnp.maximum(h + b_dn.reshape(1, -1, 1, 1), 0.0)          # bias + ReLU
    # ConvTranspose2d(k4,s2,p1) == conv(lhs_dilation=2, pad=k-1-p=2,
    # spatially flipped weight with in/out channels swapped).
    w_t = jnp.transpose(jnp.flip(w_up, axis=(2, 3)), (1, 0, 2, 3))
    y = jax.lax.conv_general_dilated(
        h, w_t, window_strides=(1, 1), padding=((2, 2), (2, 2)),
        lhs_dilation=(2, 2), dimension_numbers=("NCHW", "OIHW", "NCHW"),
        precision=jax.lax.Precision.HIGHEST)
    y = y + b_up.reshape(1, -1, 1, 1)
    mean = jnp.mean(y, axis=(2, 3), keepdims=True)               # InstanceNorm2d
    var = jnp.var(y, axis=(2, 3), keepdims=True)
    y = (y - mean) * jax.lax.rsqrt(var + 1e-5)
    return jnp.concatenate([x, y], axis=1)                       # skip concat


# ----------------------------------- main -------------------------------------

if __name__ == "__main__":
    N, Cin, H, W, Cinner = 2, 4, 16, 16, 8

    key = jax.random.PRNGKey(0)
    kx, k1, k2, k3, k4 = jax.random.split(key, 5)

    x = jax.random.normal(kx, (N, Cin, H, W), jnp.float32)

    # Parameters in PyTorch layouts:
    #   Conv2d weight:          (Cout=Cinner, Cin, kh, kw)
    #   ConvTranspose2d weight: (Cin_of_layer=Cinner, Cout=Cin, kh, kw)
    w_dn_t = jax.random.normal(k1, (Cinner, Cin, 4, 4), jnp.float32) * 0.1
    b_dn = jax.random.normal(k2, (Cinner,), jnp.float32) * 0.1
    w_up_t = jax.random.normal(k3, (Cinner, Cin, 4, 4), jnp.float32) * 0.1
    b_up = jax.random.normal(k4, (Cin,), jnp.float32) * 0.1
    params = (w_dn_t, b_dn, w_up_t, b_up)

    out = unet_block_innermost(x, params)
    out = jax.block_until_ready(out)

    assert out.shape == (N, 2 * Cin, H, W), out.shape
    assert bool(jnp.all(jnp.isfinite(out)))

    ref = _reference(x, params)
    err = float(jnp.max(jnp.abs(out - ref)))
    assert err < 1.5e-1, err     # bf16 MXU inputs vs f32 reference

    print("KERNEL_OK")
</pallas_src>

<mosaic_0001>
module attributes {stable_mosaic.version = 11 : i64} {
  func.func @kernel(%arg0: i32, %arg1: memref<1x16x146xf32, #tpu.memory_space<vmem>>, %arg2: memref<8x64xbf16, #tpu.memory_space<vmem>>, %arg3: memref<8x1xf32, #tpu.memory_space<vmem>>, %arg4: memref<4x4x32xbf16, #tpu.memory_space<vmem>>, %arg5: memref<4x1xf32, #tpu.memory_space<vmem>>, %arg6: memref<1x4x8x128xf32, #tpu.memory_space<vmem>>, %arg7: memref<16x146xbf16, #tpu.memory_space<vmem>>, %arg8: memref<8x146xbf16, #tpu.memory_space<vmem>>) attributes {dimension_semantics = [#tpu.dimension_semantics<parallel>], iteration_bounds = array<i64: 1>, scalar_prefetch = 0 : i64, scratch_operands = 2 : i64, tpu.core_type = #tpu.core_type<tc>, window_params = [{transform_indices = @transform_0, window_bounds = array<i64: 1, 16, 146>}, {pipeline_mode = #tpu.pipeline_mode<synchronous>, transform_indices = @transform_1, window_bounds = array<i64: 8, 64>}, {pipeline_mode = #tpu.pipeline_mode<synchronous>, transform_indices = @transform_2, window_bounds = array<i64: 8, 1>}, {pipeline_mode = #tpu.pipeline_mode<synchronous>, transform_indices = @transform_3, window_bounds = array<i64: 4, 4, 32>}, {pipeline_mode = #tpu.pipeline_mode<synchronous>, transform_indices = @transform_4, window_bounds = array<i64: 4, 1>}, {transform_indices = @transform_5, window_bounds = array<i64: 1, 4, 8, 128>}]} {
    %0 = tpu.iota {dimensions = array<i32: 1>} : vector<1x128xi32>
    %c7_i32 = arith.constant 7 : i32
    %1 = vector.broadcast %c7_i32 : i32 to vector<1x128xi32>
    %2 = arith.andi %0, %1 : vector<1x128xi32>
    %c3_i32 = arith.constant 3 : i32
    %3 = vector.broadcast %c3_i32 : i32 to vector<1x128xi32>
    %4 = arith.shrsi %0, %3 : vector<1x128xi32>
    %c7_i32_0 = arith.constant 7 : i32
    %5 = vector.broadcast %c7_i32_0 : i32 to vector<1x128xi32>
    %6 = arith.andi %4, %5 : vector<1x128xi32>
    %c1_i32 = arith.constant 1 : i32
    %7 = vector.broadcast %c1_i32 : i32 to vector<1x128xi32>
    %8 = arith.cmpi sge, %6, %7 : vector<1x128xi32>
    %c7_i32_1 = arith.constant 7 : i32
    %9 = vector.broadcast %c7_i32_1 : i32 to vector<1x128xi32>
    %10 = arith.cmpi slt, %6, %9 : vector<1x128xi32>
    %c1_i32_2 = arith.constant 1 : i32
    %11 = vector.broadcast %c1_i32_2 : i32 to vector<1x128xi32>
    %12 = arith.cmpi sge, %2, %11 : vector<1x128xi32>
    %c7_i32_3 = arith.constant 7 : i32
    %13 = vector.broadcast %c7_i32_3 : i32 to vector<1x128xi32>
    %14 = arith.cmpi slt, %2, %13 : vector<1x128xi32>
    %15 = arith.andi %8, %12 : vector<1x128xi1>
    %16 = arith.andi %8, %14 : vector<1x128xi1>
    %17 = arith.andi %10, %12 : vector<1x128xi1>
    %18 = arith.andi %10, %14 : vector<1x128xi1>
    %c0_i32 = arith.constant 0 : i32
    %19 = arith.cmpi eq, %arg0, %c0_i32 : i32
    %20 = arith.extui %19 : i1 to i32
    %c0_i32_4 = arith.constant 0 : i32
    %21 = arith.cmpi ne, %20, %c0_i32_4 : i32
    scf.if %21 {
      %cst_237 = arith.constant 0.000000e+00 : bf16
      %381 = vector.broadcast %cst_237 : bf16 to vector<8x9xbf16>
      %c0_238 = arith.constant 0 : index
      %c0_239 = arith.constant 0 : index
      %382 = vector.load %arg8[%c0_238, %c0_239] : memref<8x146xbf16, #tpu.memory_space<vmem>>, vector<8x9xbf16>
      tpu.vector_store %arg8[%c0_238, %c0_239], %381 {strides = array<i32>} : memref<8x146xbf16, #tpu.memory_space<vmem>>, vector<8x9xbf16>,
      %c0_240 = arith.constant 0 : index
      %c137 = arith.constant 137 : index
      %383 = vector.load %arg8[%c0_240, %c137] : memref<8x146xbf16, #tpu.memory_space<vmem>>, vector<8x9xbf16>
      tpu.vector_store %arg8[%c0_240, %c137], %381 {strides = array<i32>} : memref<8x146xbf16, #tpu.memory_space<vmem>>, vector<8x9xbf16>,
    } else {
    }
    %c0 = arith.constant 0 : index
    %c0_5 = arith.constant 0 : index
    %c0_6 = arith.constant 0 : index
    %22 = vector.load %arg1[%c0, %c0_5, %c0_6] : memref<1x16x146xf32, #tpu.memory_space<vmem>>, vector<1x16x146xf32>
    %23 = vector.shape_cast %22 : vector<1x16x146xf32> to vector<16x146xf32>
    %cst = arith.constant 0.000000e+00 : f32
    %24 = vector.broadcast %cst : f32 to vector<16x146xf32>
    %25 = arith.cmpf oge, %23, %24 : vector<16x146xf32>
    %cst_7 = arith.constant 2.000000e-01 : f32
    %26 = vector.broadcast %cst_7 : f32 to vector<16x146xf32>
    %27 = arith.mulf %26, %23 : vector<16x146xf32>
    %28 = arith.select %25, %23, %27 : vector<16x146xi1>, vector<16x146xf32>
    %29 = arith.truncf %28 : vector<16x146xf32> to vector<16x146xbf16>
    %c0_8 = arith.constant 0 : index
    %c0_9 = arith.constant 0 : index
    %30 = vector.load %arg7[%c0_8, %c0_9] : memref<16x146xbf16, #tpu.memory_space<vmem>>, vector<16x146xbf16>
    tpu.vector_store %arg7[%c0_8, %c0_9], %29 {strides = array<i32>} : memref<16x146xbf16, #tpu.memory_space<vmem>>, vector<16x146xbf16>,
    %c0_10 = arith.constant 0 : index
    %c9 = arith.constant 9 : index
    %31 = vector.load %arg7[%c0_10, %c9] : memref<16x146xbf16, #tpu.memory_space<vmem>>, vector<4x128xbf16>
    %c0_11 = arith.constant 0 : index
    %c10 = arith.constant 10 : index
    %32 = vector.load %arg7[%c0_11, %c10] : memref<16x146xbf16, #tpu.memory_space<vmem>>, vector<4x128xbf16>
    %cst_12 = arith.constant 0.000000e+00 : bf16
    %33 = vector.broadcast %cst_12 : bf16 to vector<4x128xbf16>
    %34 = vector.shape_cast %14 : vector<1x128xi1> to vector<1x128xi1>
    %35 = vector.broadcast %34 : vector<1x128xi1> to vector<4x128xi1>
    %36 = arith.select %35, %32, %33 : vector<4x128xi1>, vector<4x128xbf16>
    %c0_13 = arith.constant 0 : index
    %c17 = arith.constant 17 : index
    %37 = vector.load %arg7[%c0_13, %c17] : memref<16x146xbf16, #tpu.memory_space<vmem>>, vector<4x128xbf16>
    %cst_14 = arith.constant 0.000000e+00 : bf16
    %38 = vector.broadcast %cst_14 : bf16 to vector<4x128xbf16>
    %39 = vector.shape_cast %10 : vector<1x128xi1> to vector<1x128xi1>
    %40 = vector.broadcast %39 : vector<1x128xi1> to vector<4x128xi1>
    %41 = arith.select %40, %37, %38 : vector<4x128xi1>, vector<4x128xbf16>
    %c0_15 = arith.constant 0 : index
    %c18 = arith.constant 18 : index
    %42 = vector.load %arg7[%c0_15, %c18] : memref<16x146xbf16, #tpu.memory_space<vmem>>, vector<4x128xbf16>
    %cst_16 = arith.constant 0.000000e+00 : bf16
    %43 = vector.broadcast %cst_16 : bf16 to vector<4x128xbf16>
    %44 = vector.shape_cast %18 : vector<1x128xi1> to vector<1x128xi1>
    %45 = vector.broadcast %44 : vector<1x128xi1> to vector<4x128xi1>
    %46 = arith.select %45, %42, %43 : vector<4x128xi1>, vector<4x128xbf16>
    %c4 = arith.constant 4 : index
    %c8 = arith.constant 8 : index
    %47 = vector.load %arg7[%c4, %c8] : memref<16x146xbf16, #tpu.memory_space<vmem>>, vector<4x128xbf16>
    %cst_17 = arith.constant 0.000000e+00 : bf16
    %48 = vector.broadcast %cst_17 : bf16 to vector<4x128xbf16>
    %49 = vector.shape_cast %12 : vector<1x128xi1> to vector<1x128xi1>
    %50 = vector.broadcast %49 : vector<1x128xi1> to vector<4x128xi1>
    %51 = arith.select %50, %47, %48 : vector<4x128xi1>, vector<4x128xbf16>
    %c4_18 = arith.constant 4 : index
    %c9_19 = arith.constant 9 : index
    %52 = vector.load %arg7[%c4_18, %c9_19] : memref<16x146xbf16, #tpu.memory_space<vmem>>, vector<4x128xbf16>
    %c4_20 = arith.constant 4 : index
    %c16 = arith.constant 16 : index
    %53 = vector.load %arg7[%c4_20, %c16] : memref<16x146xbf16, #tpu.memory_space<vmem>>, vector<4x128xbf16>
    %cst_21 = arith.constant 0.000000e+00 : bf16
    %54 = vector.broadcast %cst_21 : bf16 to vector<4x128xbf16>
    %55 = vector.shape_cast %17 : vector<1x128xi1> to vector<1x128xi1>
    %56 = vector.broadcast %55 : vector<1x128xi1> to vector<4x128xi1>
    %57 = arith.select %56, %53, %54 : vector<4x128xi1>, vector<4x128xbf16>
    %c4_22 = arith.constant 4 : index
    %c17_23 = arith.constant 17 : index
    %58 = vector.load %arg7[%c4_22, %c17_23] : memref<16x146xbf16, #tpu.memory_space<vmem>>, vector<4x128xbf16>
    %cst_24 = arith.constant 0.000000e+00 : bf16
    %59 = vector.broadcast %cst_24 : bf16 to vector<4x128xbf16>
    %60 = vector.shape_cast %10 : vector<1x128xi1> to vector<1x128xi1>
    %61 = vector.broadcast %60 : vector<1x128xi1> to vector<4x128xi1>
    %62 = arith.select %61, %58, %59 : vector<4x128xi1>, vector<4x128xbf16>
    %c8_25 = arith.constant 8 : index
    %c1 = arith.constant 1 : index
    %63 = vector.load %arg7[%c8_25, %c1] : memref<16x146xbf16, #tpu.memory_space<vmem>>, vector<4x128xbf16>
    %cst_26 = arith.constant 0.000000e+00 : bf16
    %64 = vector.broadcast %cst_26 : bf16 to vector<4x128xbf16>
    %65 = vector.shape_cast %8 : vector<1x128xi1> to vector<1x128xi1>
    %66 = vector.broadcast %65 : vector<1x128xi1> to vector<4x128xi1>
    %67 = arith.select %66, %63, %64 : vector<4x128xi1>, vector<4x128xbf16>
    %c8_27 = arith.constant 8 : index
    %c2 = arith.constant 2 : index
    %68 = vector.load %arg7[%c8_27, %c2] : memref<16x146xbf16, #tpu.memory_space<vmem>>, vector<4x128xbf16>
    %cst_28 = arith.constant 0.000000e+00 : bf16
    %69 = vector.broadcast %cst_28 : bf16 to vector<4x128xbf16>
    %70 = vector.shape_cast %16 : vector<1x128xi1> to vector<1x128xi1>
    %71 = vector.broadcast %70 : vector<1x128xi1> to vector<4x128xi1>
    %72 = arith.select %71, %68, %69 : vector<4x128xi1>, vector<4x128xbf16>
    %c8_29 = arith.constant 8 : index
    %c9_30 = arith.constant 9 : index
    %73 = vector.load %arg7[%c8_29, %c9_30] : memref<16x146xbf16, #tpu.memory_space<vmem>>, vector<4x128xbf16>
    %c8_31 = arith.constant 8 : index
    %c10_32 = arith.constant 10 : index
    %74 = vector.load %arg7[%c8_31, %c10_32] : memref<16x146xbf16, #tpu.memory_space<vmem>>, vector<4x128xbf16>
    %cst_33 = arith.constant 0.000000e+00 : bf16
    %75 = vector.broadcast %cst_33 : bf16 to vector<4x128xbf16>
    %76 = vector.shape_cast %14 : vector<1x128xi1> to vector<1x128xi1>
    %77 = vector.broadcast %76 : vector<1x128xi1> to vector<4x128xi1>
    %78 = arith.select %77, %74, %75 : vector<4x128xi1>, vector<4x128xbf16>
    %c12 = arith.constant 12 : index
    %c0_34 = arith.constant 0 : index
    %79 = vector.load %arg7[%c12, %c0_34] : memref<16x146xbf16, #tpu.memory_space<vmem>>, vector<4x128xbf16>
    %cst_35 = arith.constant 0.000000e+00 : bf16
    %80 = vector.broadcast %cst_35 : bf16 to vector<4x128xbf16>
    %81 = vector.shape_cast %15 : vector<1x128xi1> to vector<1x128xi1>
    %82 = vector.broadcast %81 : vector<1x128xi1> to vector<4x128xi1>
    %83 = arith.select %82, %79, %80 : vector<4x128xi1>, vector<4x128xbf16>
    %c12_36 = arith.constant 12 : index
    %c1_37 = arith.constant 1 : index
    %84 = vector.load %arg7[%c12_36, %c1_37] : memref<16x146xbf16, #tpu.memory_space<vmem>>, vector<4x128xbf16>
    %cst_38 = arith.constant 0.000000e+00 : bf16
    %85 = vector.broadcast %cst_38 : bf16 to vector<4x128xbf16>
    %86 = vector.shape_cast %8 : vector<1x128xi1> to vector<1x128xi1>
    %87 = vector.broadcast %86 : vector<1x128xi1> to vector<4x128xi1>
    %88 = arith.select %87, %84, %85 : vector<4x128xi1>, vector<4x128xbf16>
    %c12_39 = arith.constant 12 : index
    %c8_40 = arith.constant 8 : index
    %89 = vector.load %arg7[%c12_39, %c8_40] : memref<16x146xbf16, #tpu.memory_space<vmem>>, vector<4x128xbf16>
    %cst_41 = arith.constant 0.000000e+00 : bf16
    %90 = vector.broadcast %cst_41 : bf16 to vector<4x128xbf16>
    %91 = vector.shape_cast %12 : vector<1x128xi1> to vector<1x128xi1>
    %92 = vector.broadcast %91 : vector<1x128xi1> to vector<4x128xi1>
    %93 = arith.select %92, %89, %90 : vector<4x128xi1>, vector<4x128xbf16>
    %c12_42 = arith.constant 12 : index
    %c9_43 = arith.constant 9 : index
    %94 = vector.load %arg7[%c12_42, %c9_43] : memref<16x146xbf16, #tpu.memory_space<vmem>>, vector<4x128xbf16>
    %95 = tpu.concatenate %31, %36, %41, %46, %51, %52, %57, %62, %67, %72, %73, %78, %83, %88, %93, %94 in 0 : vector<4x128xbf16>, vector<4x128xbf16>, vector<4x128xbf16>, vector<4x128xbf16>, vector<4x128xbf16>, vector<4x128xbf16>, vector<4x128xbf16>, vector<4x128xbf16>, vector<4x128xbf16>, vector<4x128xbf16>, vector<4x128xbf16>, vector<4x128xbf16>, vector<4x128xbf16>, vector<4x128xbf16>, vector<4x128xbf16>, vector<4x128xbf16> -> vector<64x128xbf16>
    %c0_44 = arith.constant 0 : index
    %c0_45 = arith.constant 0 : index
    %96 = vector.load %arg2[%c0_44, %c0_45] : memref<8x64xbf16, #tpu.memory_space<vmem>>, vector<8x64xbf16>
    %cst_46 = arith.constant dense<0.000000e+00> : vector<8x128xf32>
    %97 = tpu.matmul %96, %95, %cst_46 {dimension_numbers = #tpu.dot_dimension_numbers<[1], [0], [0], [1], [0, 0, 1, 1], [], []>} : vector<8x64xbf16>, vector<64x128xbf16>, vector<8x128xf32> -> vector<8x128xf32>
    %c0_47 = arith.constant 0 : index
    %c0_48 = arith.constant 0 : index
    %98 = vector.load %arg3[%c0_47, %c0_48] : memref<8x1xf32, #tpu.memory_space<vmem>>, vector<8x1xf32>
    %99 = vector.broadcast %98 : vector<8x1xf32> to vector<8x128xf32>
    %100 = arith.addf %97, %99 : vector<8x128xf32>
    %cst_49 = arith.constant 0.000000e+00 : f32
    %101 = vector.broadcast %cst_49 : f32 to vector<8x128xf32>
    %102 = arith.maximumf %100, %101 : vector<8x128xf32>
    %103 = arith.truncf %102 : vector<8x128xf32> to vector<8x128xbf16>
    %c0_50 = arith.constant 0 : index
    %c9_51 = arith.constant 9 : index
    %104 = vector.load %arg8[%c0_50, %c9_51] : memref<8x146xbf16, #tpu.memory_space<vmem>>, vector<8x128xbf16>
    tpu.vector_store %arg8[%c0_50, %c9_51], %103 {strides = array<i32>} : memref<8x146xbf16, #tpu.memory_space<vmem>>, vector<8x128xbf16>,
    %cst_52 = arith.constant 0.000000e+00 : f32
    %105 = vector.broadcast %cst_52 : f32 to vector<4x1xf32>
    %cst_53 = arith.constant 0.000000e+00 : f32
    %106 = vector.broadcast %cst_53 : f32 to vector<4x1xf32>
    %c0_54 = arith.constant 0 : index
    %c0_55 = arith.constant 0 : index
    %107 = vector.load %arg8[%c0_54, %c0_55] : memref<8x146xbf16, #tpu.memory_space<vmem>>, vector<8x128xbf16>
    %cst_56 = arith.constant 0.000000e+00 : bf16
    %108 = vector.broadcast %cst_56 : bf16 to vector<8x128xbf16>
    %109 = vector.shape_cast %15 : vector<1x128xi1> to vector<1x128xi1>
    %110 = vector.broadcast %109 : vector<1x128xi1> to vector<8x128xi1>
    %111 = arith.select %110, %107, %108 : vector<8x128xi1>, vector<8x128xbf16>
    %c0_57 = arith.constant 0 : index
    %c1_58 = arith.constant 1 : index
    %112 = vector.load %arg8[%c0_57, %c1_58] : memref<8x146xbf16, #tpu.memory_space<vmem>>, vector<8x128xbf16>
    %cst_59 = arith.constant 0.000000e+00 : bf16
    %113 = vector.broadcast %cst_59 : bf16 to vector<8x128xbf16>
    %114 = vector.shape_cast %8 : vector<1x128xi1> to vector<1x128xi1>
    %115 = vector.broadcast %114 : vector<1x128xi1> to vector<8x128xi1>
    %116 = arith.select %115, %112, %113 : vector<8x128xi1>, vector<8x128xbf16>
    %c0_60 = arith.constant 0 : index
    %c8_61 = arith.constant 8 : index
    %117 = vector.load %arg8[%c0_60, %c8_61] : memref<8x146xbf16, #tpu.memory_space<vmem>>, vector<8x128xbf16>
    %cst_62 = arith.constant 0.000000e+00 : bf16
    %118 = vector.broadcast %cst_62 : bf16 to vector<8x128xbf16>
    %119 = vector.shape_cast %12 : vector<1x128xi1> to vector<1x128xi1>
    %120 = vector.broadcast %119 : vector<1x128xi1> to vector<8x128xi1>
    %121 = arith.select %120, %117, %118 : vector<8x128xi1>, vector<8x128xbf16>
    %c0_63 = arith.constant 0 : index
    %c9_64 = arith.constant 9 : index
    %122 = vector.load %arg8[%c0_63, %c9_64] : memref<8x146xbf16, #tpu.memory_space<vmem>>, vector<8x128xbf16>
    %123 = tpu.concatenate %111, %116, %121, %122 in 0 : vector<8x128xbf16>, vector<8x128xbf16>, vector<8x128xbf16>, vector<8x128xbf16> -> vector<32x128xbf16>
    %c0_65 = arith.constant 0 : index
    %c0_66 = arith.constant 0 : index
    %c0_67 = arith.constant 0 : index
    %124 = vector.load %arg4[%c0_65, %c0_66, %c0_67] : memref<4x4x32xbf16, #tpu.memory_space<vmem>>, vector<1x4x32xbf16>
    %125 = vector.shape_cast %124 : vector<1x4x32xbf16> to vector<4x32xbf16>
    %cst_68 = arith.constant dense<0.000000e+00> : vector<4x128xf32>
    %126 = tpu.matmul %125, %123, %cst_68 {dimension_numbers = #tpu.dot_dimension_numbers<[1], [0], [0], [1], [0, 0, 1, 1], [], []>} : vector<4x32xbf16>, vector<32x128xbf16>, vector<4x128xf32> -> vector<4x128xf32>
    %c0_69 = arith.constant 0 : index
    %c0_70 = arith.constant 0 : index
    %127 = vector.load %arg5[%c0_69, %c0_70] : memref<4x1xf32, #tpu.memory_space<vmem>>, vector<4x1xf32>
    %128 = vector.broadcast %127 : vector<4x1xf32> to vector<4x128xf32>
    %129 = arith.addf %126, %128 : vector<4x128xf32>
    %c0_71 = arith.constant 0 : index
    %c0_72 = arith.constant 0 : index
    %c4_73 = arith.constant 4 : index
    %c0_74 = arith.constant 0 : index
    %130 = vector.load %arg6[%c0_71, %c0_72, %c4_73, %c0_74] : memref<1x4x8x128xf32, #tpu.memory_space<vmem>>, vector<1x1x4x128xf32>
    %131 = vector.shape_cast %130 : vector<1x1x4x128xf32> to vector<4x128xf32>
    %132 = vector.shape_cast %129 : vector<4x128xf32> to vector<1x1x4x128xf32>
    tpu.vector_store %arg6[%c0_71, %c0_72, %c4_73, %c0_74], %132 {strides = array<i32>} : memref<1x4x8x128xf32, #tpu.memory_space<vmem>>, vector<1x1x4x128xf32>,
    %c0_75 = arith.constant 0 : index
    %c0_76 = arith.constant 0 : index
    %c9_77 = arith.constant 9 : index
    %133 = vector.load %arg1[%c0_75, %c0_76, %c9_77] : memref<1x16x146xf32, #tpu.memory_space<vmem>>, vector<1x4x128xf32>
    %134 = vector.shape_cast %133 : vector<1x4x128xf32> to vector<4x128xf32>
    %c0_78 = arith.constant 0 : index
    %c0_79 = arith.constant 0 : index
    %c0_80 = arith.constant 0 : index
    %c0_81 = arith.constant 0 : index
    %135 = vector.load %arg6[%c0_78, %c0_79, %c0_80, %c0_81] : memref<1x4x8x128xf32, #tpu.memory_space<vmem>>, vector<1x1x4x128xf32>
    %136 = vector.shape_cast %135 : vector<1x1x4x128xf32> to vector<4x128xf32>
    %137 = vector.shape_cast %134 : vector<4x128xf32> to vector<1x1x4x128xf32>
    tpu.vector_store %arg6[%c0_78, %c0_79, %c0_80, %c0_81], %137 {strides = array<i32>} : memref<1x4x8x128xf32, #tpu.memory_space<vmem>>, vector<1x1x4x128xf32>,
    %138 = vector.extract_strided_slice %129 {offsets = [0, 0], sizes = [4, 64], strides = [1, 1]} : vector<4x128xf32> to vector<4x64xf32>
    %cst_82 = arith.constant dense<0.000000e+00> : vector<4xf32>
    %139 = vector.multi_reduction <add>, %138, %cst_82 [1] : vector<4x64xf32> to vector<4xf32>
    %140 = vector.shape_cast %139 : vector<4xf32> to vector<4x1xf32>
    %141 = arith.addf %105, %140 : vector<4x1xf32>
    %142 = vector.extract_strided_slice %129 {offsets = [0, 64], sizes = [4, 64], strides = [1, 1]} : vector<4x128xf32> to vector<4x64xf32>
    %cst_83 = arith.constant dense<0.000000e+00> : vector<4xf32>
    %143 = vector.multi_reduction <add>, %142, %cst_83 [1] : vector<4x64xf32> to vector<4xf32>
    %144 = vector.shape_cast %143 : vector<4xf32> to vector<4x1xf32>
    %145 = arith.addf %106, %144 : vector<4x1xf32>
    %c0_84 = arith.constant 0 : index
    %c1_85 = arith.constant 1 : index
    %146 = vector.load %arg8[%c0_84, %c1_85] : memref<8x146xbf16, #tpu.memory_space<vmem>>, vector<8x128xbf16>
    %cst_86 = arith.constant 0.000000e+00 : bf16
    %147 = vector.broadcast %cst_86 : bf16 to vector<8x128xbf16>
    %148 = vector.shape_cast %8 : vector<1x128xi1> to vector<1x128xi1>
    %149 = vector.broadcast %148 : vector<1x128xi1> to vector<8x128xi1>
    %150 = arith.select %149, %146, %147 : vector<8x128xi1>, vector<8x128xbf16>
    %c0_87 = arith.constant 0 : index
    %c2_88 = arith.constant 2 : index
    %151 = vector.load %arg8[%c0_87, %c2_88] : memref<8x146xbf16, #tpu.memory_space<vmem>>, vector<8x128xbf16>
    %cst_89 = arith.constant 0.000000e+00 : bf16
    %152 = vector.broadcast %cst_89 : bf16 to vector<8x128xbf16>
    %153 = vector.shape_cast %16 : vector<1x128xi1> to vector<1x128xi1>
    %154 = vector.broadcast %153 : vector<1x128xi1> to vector<8x128xi1>
    %155 = arith.select %154, %151, %152 : vector<8x128xi1>, vector<8x128xbf16>
    %c0_90 = arith.constant 0 : index
    %c9_91 = arith.constant 9 : index
    %156 = vector.load %arg8[%c0_90, %c9_91] : memref<8x146xbf16, #tpu.memory_space<vmem>>, vector<8x128xbf16>
    %c0_92 = arith.constant 0 : index
    %c10_93 = arith.constant 10 : index
    %157 = vector.load %arg8[%c0_92, %c10_93] : memref<8x146xbf16, #tpu.memory_space<vmem>>, vector<8x128xbf16>
    %cst_94 = arith.constant 0.000000e+00 : bf16
    %158 = vector.broadcast %cst_94 : bf16 to vector<8x128xbf16>
    %159 = vector.shape_cast %14 : vector<1x128xi1> to vector<1x128xi1>
    %160 = vector.broadcast %159 : vector<1x128xi1> to vector<8x128xi1>
    %161 = arith.select %160, %157, %158 : vector<8x128xi1>, vector<8x128xbf16>
    %162 = tpu.concatenate %150, %155, %156, %161 in 0 : vector<8x128xbf16>, vector<8x128xbf16>, vector<8x128xbf16>, vector<8x128xbf16> -> vector<32x128xbf16>
    %c1_95 = arith.constant 1 : index
    %c0_96 = arith.constant 0 : index
    %c0_97 = arith.constant 0 : index
    %163 = vector.load %arg4[%c1_95, %c0_96, %c0_97] : memref<4x4x32xbf16, #tpu.memory_space<vmem>>, vector<1x4x32xbf16>
    %164 = vector.shape_cast %163 : vector<1x4x32xbf16> to vector<4x32xbf16>
    %cst_98 = arith.constant dense<0.000000e+00> : vector<4x128xf32>
    %165 = tpu.matmul %164, %162, %cst_98 {dimension_numbers = #tpu.dot_dimension_numbers<[1], [0], [0], [1], [0, 0, 1, 1], [], []>} : vector<4x32xbf16>, vector<32x128xbf16>, vector<4x128xf32> -> vector<4x128xf32>
    %c0_99 = arith.constant 0 : index
    %c0_100 = arith.constant 0 : index
    %166 = vector.load %arg5[%c0_99, %c0_100] : memref<4x1xf32, #tpu.memory_space<vmem>>, vector<4x1xf32>
    %167 = vector.broadcast %166 : vector<4x1xf32> to vector<4x128xf32>
    %168 = arith.addf %165, %167 : vector<4x128xf32>
    %c0_101 = arith.constant 0 : index
    %c1_102 = arith.constant 1 : index
    %c4_103 = arith.constant 4 : index
    %c0_104 = arith.constant 0 : index
    %169 = vector.load %arg6[%c0_101, %c1_102, %c4_103, %c0_104] : memref<1x4x8x128xf32, #tpu.memory_space<vmem>>, vector<1x1x4x128xf32>
    %170 = vector.shape_cast %169 : vector<1x1x4x128xf32> to vector<4x128xf32>
    %171 = vector.shape_cast %168 : vector<4x128xf32> to vector<1x1x4x128xf32>
    tpu.vector_store %arg6[%c0_101, %c1_102, %c4_103, %c0_104], %171 {strides = array<i32>} : memref<1x4x8x128xf32, #tpu.memory_space<vmem>>, vector<1x1x4x128xf32>,
    %c0_105 = arith.constant 0 : index
    %c4_106 = arith.constant 4 : index
    %c9_107 = arith.constant 9 : index
    %172 = vector.load %arg1[%c0_105, %c4_106, %c9_107] : memref<1x16x146xf32, #tpu.memory_space<vmem>>, vector<1x4x128xf32>
    %173 = vector.shape_cast %172 : vector<1x4x128xf32> to vector<4x128xf32>
    %c0_108 = arith.constant 0 : index
    %c1_109 = arith.constant 1 : index
    %c0_110 = arith.constant 0 : index
    %c0_111 = arith.constant 0 : index
    %174 = vector.load %arg6[%c0_108, %c1_109, %c0_110, %c0_111] : memref<1x4x8x128xf32, #tpu.memory_space<vmem>>, vector<1x1x4x128xf32>
    %175 = vector.shape_cast %174 : vector<1x1x4x128xf32> to vector<4x128xf32>
    %176 = vector.shape_cast %173 : vector<4x128xf32> to vector<1x1x4x128xf32>
    tpu.vector_store %arg6[%c0_108, %c1_109, %c0_110, %c0_111], %176 {strides = array<i32>} : memref<1x4x8x128xf32, #tpu.memory_space<vmem>>, vector<1x1x4x128xf32>,
    %177 = vector.extract_strided_slice %168 {offsets = [0, 0], sizes = [4, 64], strides = [1, 1]} : vector<4x128xf32> to vector<4x64xf32>
    %cst_112 = arith.constant dense<0.000000e+00> : vector<4xf32>
    %178 = vector.multi_reduction <add>, %177, %cst_112 [1] : vector<4x64xf32> to vector<4xf32>
    %179 = vector.shape_cast %178 : vector<4xf32> to vector<4x1xf32>
    %180 = arith.addf %141, %179 : vector<4x1xf32>
    %181 = vector.extract_strided_slice %168 {offsets = [0, 64], sizes = [4, 64], strides = [1, 1]} : vector<4x128xf32> to vector<4x64xf32>
    %cst_113 = arith.constant dense<0.000000e+00> : vector<4xf32>
    %182 = vector.multi_reduction <add>, %181, %cst_113 [1] : vector<4x64xf32> to vector<4xf32>
    %183 = vector.shape_cast %182 : vector<4xf32> to vector<4x1xf32>
    %184 = arith.addf %145, %183 : vector<4x1xf32>
    %c0_114 = arith.constant 0 : index
    %c8_115 = arith.constant 8 : index
    %185 = vector.load %arg8[%c0_114, %c8_115] : memref<8x146xbf16, #tpu.memory_space<vmem>>, vector<8x128xbf16>
    %cst_116 = arith.constant 0.000000e+00 : bf16
    %186 = vector.broadcast %cst_116 : bf16 to vector<8x128xbf16>
    %187 = vector.shape_cast %12 : vector<1x128xi1> to vector<1x128xi1>
    %188 = vector.broadcast %187 : vector<1x128xi1> to vector<8x128xi1>
    %189 = arith.select %188, %185, %186 : vector<8x128xi1>, vector<8x128xbf16>
    %c0_117 = arith.constant 0 : index
    %c9_118 = arith.constant 9 : index
    %190 = vector.load %arg8[%c0_117, %c9_118] : memref<8x146xbf16, #tpu.memory_space<vmem>>, vector<8x128xbf16>
    %c0_119 = arith.constant 0 : index
    %c16_120 = arith.constant 16 : index
    %191 = vector.load %arg8[%c0_119, %c16_120] : memref<8x146xbf16, #tpu.memory_space<vmem>>, vector<8x128xbf16>
    %cst_121 = arith.constant 0.000000e+00 : bf16
    %192 = vector.broadcast %cst_121 : bf16 to vector<8x128xbf16>
    %193 = vector.shape_cast %17 : vector<1x128xi1> to vector<1x128xi1>
    %194 = vector.broadcast %193 : vector<1x128xi1> to vector<8x128xi1>
    %195 = arith.select %194, %191, %192 : vector<8x128xi1>, vector<8x128xbf16>
    %c0_122 = arith.constant 0 : index
    %c17_123 = arith.constant 17 : index
    %196 = vector.load %arg8[%c0_122, %c17_123] : memref<8x146xbf16, #tpu.memory_space<vmem>>, vector<8x128xbf16>
    %cst_124 = arith.constant 0.000000e+00 : bf16
    %197 = vector.broadcast %cst_124 : bf16 to vector<8x128xbf16>
    %198 = vector.shape_cast %10 : vector<1x128xi1> to vector<1x128xi1>
    %199 = vector.broadcast %198 : vector<1x128xi1> to vector<8x128xi1>
    %200 = arith.select %199, %196, %197 : vector<8x128xi1>, vector<8x128xbf16>
    %201 = tpu.concatenate %189, %190, %195, %200 in 0 : vector<8x128xbf16>, vector<8x128xbf16>, vector<8x128xbf16>, vector<8x128xbf16> -> vector<32x128xbf16>
    %c2_125 = arith.constant 2 : index
    %c0_126 = arith.constant 0 : index
    %c0_127 = arith.constant 0 : index
    %202 = vector.load %arg4[%c2_125, %c0_126, %c0_127] : memref<4x4x32xbf16, #tpu.memory_space<vmem>>, vector<1x4x32xbf16>
    %203 = vector.shape_cast %202 : vector<1x4x32xbf16> to vector<4x32xbf16>
    %cst_128 = arith.constant dense<0.000000e+00> : vector<4x128xf32>
    %204 = tpu.matmul %203, %201, %cst_128 {dimension_numbers = #tpu.dot_dimension_numbers<[1], [0], [0], [1], [0, 0, 1, 1], [], []>} : vector<4x32xbf16>, vector<32x128xbf16>, vector<4x128xf32> -> vector<4x128xf32>
    %c0_129 = arith.constant 0 : index
    %c0_130 = arith.constant 0 : index
    %205 = vector.load %arg5[%c0_129, %c0_130] : memref<4x1xf32, #tpu.memory_space<vmem>>, vector<4x1xf32>
    %206 = vector.broadcast %205 : vector<4x1xf32> to vector<4x128xf32>
    %207 = arith.addf %204, %206 : vector<4x128xf32>
    %c0_131 = arith.constant 0 : index
    %c2_132 = arith.constant 2 : index
    %c4_133 = arith.constant 4 : index
    %c0_134 = arith.constant 0 : index
    %208 = vector.load %arg6[%c0_131, %c2_132, %c4_133, %c0_134] : memref<1x4x8x128xf32, #tpu.memory_space<vmem>>, vector<1x1x4x128xf32>
    %209 = vector.shape_cast %208 : vector<1x1x4x128xf32> to vector<4x128xf32>
    %210 = vector.shape_cast %207 : vector<4x128xf32> to vector<1x1x4x128xf32>
    tpu.vector_store %arg6[%c0_131, %c2_132, %c4_133, %c0_134], %210 {strides = array<i32>} : memref<1x4x8x128xf32, #tpu.memory_space<vmem>>, vector<1x1x4x128xf32>,
    %c0_135 = arith.constant 0 : index
    %c8_136 = arith.constant 8 : index
    %c9_137 = arith.constant 9 : index
    %211 = vector.load %arg1[%c0_135, %c8_136, %c9_137] : memref<1x16x146xf32, #tpu.memory_space<vmem>>, vector<1x4x128xf32>
    %212 = vector.shape_cast %211 : vector<1x4x128xf32> to vector<4x128xf32>
    %c0_138 = arith.constant 0 : index
    %c2_139 = arith.constant 2 : index
    %c0_140 = arith.constant 0 : index
    %c0_141 = arith.constant 0 : index
    %213 = vector.load %arg6[%c0_138, %c2_139, %c0_140, %c0_141] : memref<1x4x8x128xf32, #tpu.memory_space<vmem>>, vector<1x1x4x128xf32>
    %214 = vector.shape_cast %213 : vector<1x1x4x128xf32> to vector<4x128xf32>
    %215 = vector.shape_cast %212 : vector<4x128xf32> to vector<1x1x4x128xf32>
    tpu.vector_store %arg6[%c0_138, %c2_139, %c0_140, %c0_141], %215 {strides = array<i32>} : memref<1x4x8x128xf32, #tpu.memory_space<vmem>>, vector<1x1x4x128xf32>,
    %216 = vector.extract_strided_slice %207 {offsets = [0, 0], sizes = [4, 64], strides = [1, 1]} : vector<4x128xf32> to vector<4x64xf32>
    %cst_142 = arith.constant dense<0.000000e+00> : vector<4xf32>
    %217 = vector.multi_reduction <add>, %216, %cst_142 [1] : vector<4x64xf32> to vector<4xf32>
    %218 = vector.shape_cast %217 : vector<4xf32> to vector<4x1xf32>
    %219 = arith.addf %180, %218 : vector<4x1xf32>
    %220 = vector.extract_strided_slice %207 {offsets = [0, 64], sizes = [4, 64], strides = [1, 1]} : vector<4x128xf32> to vector<4x64xf32>
    %cst_143 = arith.constant dense<0.000000e+00> : vector<4xf32>
    %221 = vector.multi_reduction <add>, %220, %cst_143 [1] : vector<4x64xf32> to vector<4xf32>
    %222 = vector.shape_cast %221 : vector<4xf32> to vector<4x1xf32>
    %223 = arith.addf %184, %222 : vector<4x1xf32>
    %c0_144 = arith.constant 0 : index
    %c9_145 = arith.constant 9 : index
    %224 = vector.load %arg8[%c0_144, %c9_145] : memref<8x146xbf16, #tpu.memory_space<vmem>>, vector<8x128xbf16>
    %c0_146 = arith.constant 0 : index
    %c10_147 = arith.constant 10 : index
    %225 = vector.load %arg8[%c0_146, %c10_147] : memref<8x146xbf16, #tpu.memory_space<vmem>>, vector<8x128xbf16>
    %cst_148 = arith.constant 0.000000e+00 : bf16
    %226 = vector.broadcast %cst_148 : bf16 to vector<8x128xbf16>
    %227 = vector.shape_cast %14 : vector<1x128xi1> to vector<1x128xi1>
    %228 = vector.broadcast %227 : vector<1x128xi1> to vector<8x128xi1>
    %229 = arith.select %228, %225, %226 : vector<8x128xi1>, vector<8x128xbf16>
    %c0_149 = arith.constant 0 : index
    %c17_150 = arith.constant 17 : index
    %230 = vector.load %arg8[%c0_149, %c17_150] : memref<8x146xbf16, #tpu.memory_space<vmem>>, vector<8x128xbf16>
    %cst_151 = arith.constant 0.000000e+00 : bf16
    %231 = vector.broadcast %cst_151 : bf16 to vector<8x128xbf16>
    %232 = vector.shape_cast %10 : vector<1x128xi1> to vector<1x128xi1>
    %233 = vector.broadcast %232 : vector<1x128xi1> to vector<8x128xi1>
    %234 = arith.select %233, %230, %231 : vector<8x128xi1>, vector<8x128xbf16>
    %c0_152 = arith.constant 0 : index
    %c18_153 = arith.constant 18 : index
    %235 = vector.load %arg8[%c0_152, %c18_153] : memref<8x146xbf16, #tpu.memory_space<vmem>>, vector<8x128xbf16>
    %cst_154 = arith.constant 0.000000e+00 : bf16
    %236 = vector.broadcast %cst_154 : bf16 to vector<8x128xbf16>
    %237 = vector.shape_cast %18 : vector<1x128xi1> to vector<1x128xi1>
    %238 = vector.broadcast %237 : vector<1x128xi1> to vector<8x128xi1>
    %239 = arith.select %238, %235, %236 : vector<8x128xi1>, vector<8x128xbf16>
    %240 = tpu.concatenate %224, %229, %234, %239 in 0 : vector<8x128xbf16>, vector<8x128xbf16>, vector<8x128xbf16>, vector<8x128xbf16> -> vector<32x128xbf16>
    %c3 = arith.constant 3 : index
    %c0_155 = arith.constant 0 : index
    %c0_156 = arith.constant 0 : index
    %241 = vector.load %arg4[%c3, %c0_155, %c0_156] : memref<4x4x32xbf16, #tpu.memory_space<vmem>>, vector<1x4x32xbf16>
    %242 = vector.shape_cast %241 : vector<1x4x32xbf16> to vector<4x32xbf16>
    %cst_157 = arith.constant dense<0.000000e+00> : vector<4x128xf32>
    %243 = tpu.matmul %242, %240, %cst_157 {dimension_numbers = #tpu.dot_dimension_numbers<[1], [0], [0], [1], [0, 0, 1, 1], [], []>} : vector<4x32xbf16>, vector<32x128xbf16>, vector<4x128xf32> -> vector<4x128xf32>
    %c0_158 = arith.constant 0 : index
    %c0_159 = arith.constant 0 : index
    %244 = vector.load %arg5[%c0_158, %c0_159] : memref<4x1xf32, #tpu.memory_space<vmem>>, vector<4x1xf32>
    %245 = vector.broadcast %244 : vector<4x1xf32> to vector<4x128xf32>
    %246 = arith.addf %243, %245 : vector<4x128xf32>
    %c0_160 = arith.constant 0 : index
    %c3_161 = arith.constant 3 : index
    %c4_162 = arith.constant 4 : index
    %c0_163 = arith.constant 0 : index
    %247 = vector.load %arg6[%c0_160, %c3_161, %c4_162, %c0_163] : memref<1x4x8x128xf32, #tpu.memory_space<vmem>>, vector<1x1x4x128xf32>
    %248 = vector.shape_cast %247 : vector<1x1x4x128xf32> to vector<4x128xf32>
    %249 = vector.shape_cast %246 : vector<4x128xf32> to vector<1x1x4x128xf32>
    tpu.vector_store %arg6[%c0_160, %c3_161, %c4_162, %c0_163], %249 {strides = array<i32>} : memref<1x4x8x128xf32, #tpu.memory_space<vmem>>, vector<1x1x4x128xf32>,
    %c0_164 = arith.constant 0 : index
    %c12_165 = arith.constant 12 : index
    %c9_166 = arith.constant 9 : index
    %250 = vector.load %arg1[%c0_164, %c12_165, %c9_166] : memref<1x16x146xf32, #tpu.memory_space<vmem>>, vector<1x4x128xf32>
    %251 = vector.shape_cast %250 : vector<1x4x128xf32> to vector<4x128xf32>
    %c0_167 = arith.constant 0 : index
    %c3_168 = arith.constant 3 : index
    %c0_169 = arith.constant 0 : index
    %c0_170 = arith.constant 0 : index
    %252 = vector.load %arg6[%c0_167, %c3_168, %c0_169, %c0_170] : memref<1x4x8x128xf32, #tpu.memory_space<vmem>>, vector<1x1x4x128xf32>
    %253 = vector.shape_cast %252 : vector<1x1x4x128xf32> to vector<4x128xf32>
    %254 = vector.shape_cast %251 : vector<4x128xf32> to vector<1x1x4x128xf32>
    tpu.vector_store %arg6[%c0_167, %c3_168, %c0_169, %c0_170], %254 {strides = array<i32>} : memref<1x4x8x128xf32, #tpu.memory_space<vmem>>, vector<1x1x4x128xf32>,
    %255 = vector.extract_strided_slice %246 {offsets = [0, 0], sizes = [4, 64], strides = [1, 1]} : vector<4x128xf32> to vector<4x64xf32>
    %cst_171 = arith.constant dense<0.000000e+00> : vector<4xf32>
    %256 = vector.multi_reduction <add>, %255, %cst_171 [1] : vector<4x64xf32> to vector<4xf32>
    %257 = vector.shape_cast %256 : vector<4xf32> to vector<4x1xf32>
    %258 = arith.addf %219, %257 : vector<4x1xf32>
    %259 = vector.extract_strided_slice %246 {offsets = [0, 64], sizes = [4, 64], strides = [1, 1]} : vector<4x128xf32> to vector<4x64xf32>
    %cst_172 = arith.constant dense<0.000000e+00> : vector<4xf32>
    %260 = vector.multi_reduction <add>, %259, %cst_172 [1] : vector<4x64xf32> to vector<4xf32>
    %261 = vector.shape_cast %260 : vector<4xf32> to vector<4x1xf32>
    %262 = arith.addf %223, %261 : vector<4x1xf32>
    %cst_173 = arith.constant 3.906250e-03 : f32
    %263 = vector.broadcast %cst_173 : f32 to vector<4x1xf32>
    %264 = arith.mulf %258, %263 : vector<4x1xf32>
    %cst_174 = arith.constant 3.906250e-03 : f32
    %265 = vector.broadcast %cst_174 : f32 to vector<4x1xf32>
    %266 = arith.mulf %262, %265 : vector<4x1xf32>
    %cst_175 = arith.constant 0.000000e+00 : f32
    %267 = vector.broadcast %cst_175 : f32 to vector<4x1xf32>
    %cst_176 = arith.constant 0.000000e+00 : f32
    %268 = vector.broadcast %cst_176 : f32 to vector<4x1xf32>
    %c0_177 = arith.constant 0 : index
    %c0_178 = arith.constant 0 : index
    %c4_179 = arith.constant 4 : index
    %c0_180 = arith.constant 0 : index
    %269 = vector.load %arg6[%c0_177, %c0_178, %c4_179, %c0_180] : memref<1x4x8x128xf32, #tpu.memory_space<vmem>>, vector<1x1x4x128xf32>
    %270 = vector.shape_cast %269 : vector<1x1x4x128xf32> to vector<4x128xf32>
    %271 = vector.extract_strided_slice %270 {offsets = [0, 0], sizes = [4, 64], strides = [1, 1]} : vector<4x128xf32> to vector<4x64xf32>
    %272 = vector.broadcast %264 : vector<4x1xf32> to vector<4x64xf32>
    %273 = arith.subf %271, %272 : vector<4x64xf32>
    %274 = arith.mulf %273, %273 : vector<4x64xf32>
    %cst_181 = arith.constant dense<0.000000e+00> : vector<4xf32>
    %275 = vector.multi_reduction <add>, %274, %cst_181 [1] : vector<4x64xf32> to vector<4xf32>
    %276 = vector.shape_cast %275 : vector<4xf32> to vector<4x1xf32>
    %277 = arith.addf %267, %276 : vector<4x1xf32>
    %278 = vector.extract_strided_slice %270 {offsets = [0, 64], sizes = [4, 64], strides = [1, 1]} : vector<4x128xf32> to vector<4x64xf32>
    %279 = vector.broadcast %266 : vector<4x1xf32> to vector<4x64xf32>
    %280 = arith.subf %278, %279 : vector<4x64xf32>
    %281 = arith.mulf %280, %280 : vector<4x64xf32>
    %cst_182 = arith.constant dense<0.000000e+00> : vector<4xf32>
    %282 = vector.multi_reduction <add>, %281, %cst_182 [1] : vector<4x64xf32> to vector<4xf32>
    %283 = vector.shape_cast %282 : vector<4xf32> to vector<4x1xf32>
    %284 = arith.addf %268, %283 : vector<4x1xf32>
    %c0_183 = arith.constant 0 : index
    %c1_184 = arith.constant 1 : index
    %c4_185 = arith.constant 4 : index
    %c0_186 = arith.constant 0 : index
    %285 = vector.load %arg6[%c0_183, %c1_184, %c4_185, %c0_186] : memref<1x4x8x128xf32, #tpu.memory_space<vmem>>, vector<1x1x4x128xf32>
    %286 = vector.shape_cast %285 : vector<1x1x4x128xf32> to vector<4x128xf32>
    %287 = vector.extract_strided_slice %286 {offsets = [0, 0], sizes = [4, 64], strides = [1, 1]} : vector<4x128xf32> to vector<4x64xf32>
    %288 = vector.broadcast %264 : vector<4x1xf32> to vector<4x64xf32>
    %289 = arith.subf %287, %288 : vector<4x64xf32>
    %290 = arith.mulf %289, %289 : vector<4x64xf32>
    %cst_187 = arith.constant dense<0.000000e+00> : vector<4xf32>
    %291 = vector.multi_reduction <add>, %290, %cst_187 [1] : vector<4x64xf32> to vector<4xf32>
    %292 = vector.shape_cast %291 : vector<4xf32> to vector<4x1xf32>
    %293 = arith.addf %277, %292 : vector<4x1xf32>
    %294 = vector.extract_strided_slice %286 {offsets = [0, 64], sizes = [4, 64], strides = [1, 1]} : vector<4x128xf32> to vector<4x64xf32>
    %295 = vector.broadcast %266 : vector<4x1xf32> to vector<4x64xf32>
    %296 = arith.subf %294, %295 : vector<4x64xf32>
    %297 = arith.mulf %296, %296 : vector<4x64xf32>
    %cst_188 = arith.constant dense<0.000000e+00> : vector<4xf32>
    %298 = vector.multi_reduction <add>, %297, %cst_188 [1] : vector<4x64xf32> to vector<4xf32>
    %299 = vector.shape_cast %298 : vector<4xf32> to vector<4x1xf32>
    %300 = arith.addf %284, %299 : vector<4x1xf32>
    %c0_189 = arith.constant 0 : index
    %c2_190 = arith.constant 2 : index
    %c4_191 = arith.constant 4 : index
    %c0_192 = arith.constant 0 : index
    %301 = vector.load %arg6[%c0_189, %c2_190, %c4_191, %c0_192] : memref<1x4x8x128xf32, #tpu.memory_space<vmem>>, vector<1x1x4x128xf32>
    %302 = vector.shape_cast %301 : vector<1x1x4x128xf32> to vector<4x128xf32>
    %303 = vector.extract_strided_slice %302 {offsets = [0, 0], sizes = [4, 64], strides = [1, 1]} : vector<4x128xf32> to vector<4x64xf32>
    %304 = vector.broadcast %264 : vector<4x1xf32> to vector<4x64xf32>
    %305 = arith.subf %303, %304 : vector<4x64xf32>
    %306 = arith.mulf %305, %305 : vector<4x64xf32>
    %cst_193 = arith.constant dense<0.000000e+00> : vector<4xf32>
    %307 = vector.multi_reduction <add>, %306, %cst_193 [1] : vector<4x64xf32> to vector<4xf32>
    %308 = vector.shape_cast %307 : vector<4xf32> to vector<4x1xf32>
    %309 = arith.addf %293, %308 : vector<4x1xf32>
    %310 = vector.extract_strided_slice %302 {offsets = [0, 64], sizes = [4, 64], strides = [1, 1]} : vector<4x128xf32> to vector<4x64xf32>
    %311 = vector.broadcast %266 : vector<4x1xf32> to vector<4x64xf32>
    %312 = arith.subf %310, %311 : vector<4x64xf32>
    %313 = arith.mulf %312, %312 : vector<4x64xf32>
    %cst_194 = arith.constant dense<0.000000e+00> : vector<4xf32>
    %314 = vector.multi_reduction <add>, %313, %cst_194 [1] : vector<4x64xf32> to vector<4xf32>
    %315 = vector.shape_cast %314 : vector<4xf32> to vector<4x1xf32>
    %316 = arith.addf %300, %315 : vector<4x1xf32>
    %c0_195 = arith.constant 0 : index
    %c3_196 = arith.constant 3 : index
    %c4_197 = arith.constant 4 : index
    %c0_198 = arith.constant 0 : index
    %317 = vector.load %arg6[%c0_195, %c3_196, %c4_197, %c0_198] : memref<1x4x8x128xf32, #tpu.memory_space<vmem>>, vector<1x1x4x128xf32>
    %318 = vector.shape_cast %317 : vector<1x1x4x128xf32> to vector<4x128xf32>
    %319 = vector.extract_strided_slice %318 {offsets = [0, 0], sizes = [4, 64], strides = [1, 1]} : vector<4x128xf32> to vector<4x64xf32>
    %320 = vector.broadcast %264 : vector<4x1xf32> to vector<4x64xf32>
    %321 = arith.subf %319, %320 : vector<4x64xf32>
    %322 = arith.mulf %321, %321 : vector<4x64xf32>
    %cst_199 = arith.constant dense<0.000000e+00> : vector<4xf32>
    %323 = vector.multi_reduction <add>, %322, %cst_199 [1] : vector<4x64xf32> to vector<4xf32>
    %324 = vector.shape_cast %323 : vector<4xf32> to vector<4x1xf32>
    %325 = arith.addf %309, %324 : vector<4x1xf32>
    %326 = vector.extract_strided_slice %318 {offsets = [0, 64], sizes = [4, 64], strides = [1, 1]} : vector<4x128xf32> to vector<4x64xf32>
    %327 = vector.broadcast %266 : vector<4x1xf32> to vector<4x64xf32>
    %328 = arith.subf %326, %327 : vector<4x64xf32>
    %329 = arith.mulf %328, %328 : vector<4x64xf32>
    %cst_200 = arith.constant dense<0.000000e+00> : vector<4xf32>
    %330 = vector.multi_reduction <add>, %329, %cst_200 [1] : vector<4x64xf32> to vector<4xf32>
    %331 = vector.shape_cast %330 : vector<4xf32> to vector<4x1xf32>
    %332 = arith.addf %316, %331 : vector<4x1xf32>
    %cst_201 = arith.constant 3.906250e-03 : f32
    %333 = vector.broadcast %cst_201 : f32 to vector<4x1xf32>
    %334 = arith.mulf %325, %333 : vector<4x1xf32>
    %cst_202 = arith.constant 9.99999974E-6 : f32
    %335 = vector.broadcast %cst_202 : f32 to vector<4x1xf32>
    %336 = arith.addf %334, %335 : vector<4x1xf32>
    %337 = math.rsqrt %336 : vector<4x1xf32>
    %cst_203 = arith.constant 3.906250e-03 : f32
    %338 = vector.broadcast %cst_203 : f32 to vector<4x1xf32>
    %339 = arith.mulf %332, %338 : vector<4x1xf32>
    %cst_204 = arith.constant 9.99999974E-6 : f32
    %340 = vector.broadcast %cst_204 : f32 to vector<4x1xf32>
    %341 = arith.addf %339, %340 : vector<4x1xf32>
    %342 = math.rsqrt %341 : vector<4x1xf32>
    %343 = vector.shape_cast %264 : vector<4x1xf32> to vector<4x1xf32>
    %344 = vector.broadcast %343 : vector<4x1xf32> to vector<4x64xf32>
    %345 = vector.shape_cast %266 : vector<4x1xf32> to vector<4x1xf32>
    %346 = vector.broadcast %345 : vector<4x1xf32> to vector<4x64xf32>
    %347 = tpu.concatenate %344, %346 in 1 : vector<4x64xf32>, vector<4x64xf32> -> vector<4x128xf32>
    %348 = vector.shape_cast %337 : vector<4x1xf32> to vector<4x1xf32>
    %349 = vector.broadcast %348 : vector<4x1xf32> to vector<4x64xf32>
    %350 = vector.shape_cast %342 : vector<4x1xf32> to vector<4x1xf32>
    %351 = vector.broadcast %350 : vector<4x1xf32> to vector<4x64xf32>
    %352 = tpu.concatenate %349, %351 in 1 : vector<4x64xf32>, vector<4x64xf32> -> vector<4x128xf32>
    %c0_205 = arith.constant 0 : index
    %c0_206 = arith.constant 0 : index
    %c4_207 = arith.constant 4 : index
    %c0_208 = arith.constant 0 : index
    %353 = vector.load %arg6[%c0_205, %c0_206, %c4_207, %c0_208] : memref<1x4x8x128xf32, #tpu.memory_space<vmem>>, vector<1x1x4x128xf32>
    %354 = vector.shape_cast %353 : vector<1x1x4x128xf32> to vector<4x128xf32>
    %355 = arith.subf %354, %347 : vector<4x128xf32>
    %356 = arith.mulf %355, %352 : vector<4x128xf32>
    %c0_209 = arith.constant 0 : index
    %c0_210 = arith.constant 0 : index
    %c4_211 = arith.constant 4 : index
    %c0_212 = arith.constant 0 : index
    %357 = vector.load %arg6[%c0_209, %c0_210, %c4_211, %c0_212] : memref<1x4x8x128xf32, #tpu.memory_space<vmem>>, vector<1x1x4x128xf32>
    %358 = vector.shape_cast %357 : vector<1x1x4x128xf32> to vector<4x128xf32>
    %359 = vector.shape_cast %356 : vector<4x128xf32> to vector<1x1x4x128xf32>
    tpu.vector_store %arg6[%c0_209, %c0_210, %c4_211, %c0_212], %359 {strides = array<i32>} : memref<1x4x8x128xf32, #tpu.memory_space<vmem>>, vector<1x1x4x128xf32>,
    %c0_213 = arith.constant 0 : index
    %c1_214 = arith.constant 1 : index
    %c4_215 = arith.constant 4 : index
    %c0_216 = arith.constant 0 : index
    %360 = vector.load %arg6[%c0_213, %c1_214, %c4_215, %c0_216] : memref<1x4x8x128xf32, #tpu.memory_space<vmem>>, vector<1x1x4x128xf32>
    %361 = vector.shape_cast %360 : vector<1x1x4x128xf32> to vector<4x128xf32>
    %362 = arith.subf %361, %347 : vector<4x128xf32>
    %363 = arith.mulf %362, %352 : vector<4x128xf32>
    %c0_217 = arith.constant 0 : index
    %c1_218 = arith.constant 1 : index
    %c4_219 = arith.constant 4 : index
    %c0_220 = arith.constant 0 : index
    %364 = vector.load %arg6[%c0_217, %c1_218, %c4_219, %c0_220] : memref<1x4x8x128xf32, #tpu.memory_space<vmem>>, vector<1x1x4x128xf32>
    %365 = vector.shape_cast %364 : vector<1x1x4x128xf32> to vector<4x128xf32>
    %366 = vector.shape_cast %363 : vector<4x128xf32> to vector<1x1x4x128xf32>
    tpu.vector_store %arg6[%c0_217, %c1_218, %c4_219, %c0_220], %366 {strides = array<i32>} : memref<1x4x8x128xf32, #tpu.memory_space<vmem>>, vector<1x1x4x128xf32>,
    %c0_221 = arith.constant 0 : index
    %c2_222 = arith.constant 2 : index
    %c4_223 = arith.constant 4 : index
    %c0_224 = arith.constant 0 : index
    %367 = vector.load %arg6[%c0_221, %c2_222, %c4_223, %c0_224] : memref<1x4x8x128xf32, #tpu.memory_space<vmem>>, vector<1x1x4x128xf32>
    %368 = vector.shape_cast %367 : vector<1x1x4x128xf32> to vector<4x128xf32>
    %369 = arith.subf %368, %347 : vector<4x128xf32>
    %370 = arith.mulf %369, %352 : vector<4x128xf32>
    %c0_225 = arith.constant 0 : index
    %c2_226 = arith.constant 2 : index
    %c4_227 = arith.constant 4 : index
    %c0_228 = arith.constant 0 : index
    %371 = vector.load %arg6[%c0_225, %c2_226, %c4_227, %c0_228] : memref<1x4x8x128xf32, #tpu.memory_space<vmem>>, vector<1x1x4x128xf32>
    %372 = vector.shape_cast %371 : vector<1x1x4x128xf32> to vector<4x128xf32>
    %373 = vector.shape_cast %370 : vector<4x128xf32> to vector<1x1x4x128xf32>
    tpu.vector_store %arg6[%c0_225, %c2_226, %c4_227, %c0_228], %373 {strides = array<i32>} : memref<1x4x8x128xf32, #tpu.memory_space<vmem>>, vector<1x1x4x128xf32>,
    %c0_229 = arith.constant 0 : index
    %c3_230 = arith.constant 3 : index
    %c4_231 = arith.constant 4 : index
    %c0_232 = arith.constant 0 : index
    %374 = vector.load %arg6[%c0_229, %c3_230, %c4_231, %c0_232] : memref<1x4x8x128xf32, #tpu.memory_space<vmem>>, vector<1x1x4x128xf32>
    %375 = vector.shape_cast %374 : vector<1x1x4x128xf32> to vector<4x128xf32>
    %376 = arith.subf %375, %347 : vector<4x128xf32>
    %377 = arith.mulf %376, %352 : vector<4x128xf32>
    %c0_233 = arith.constant 0 : index
    %c3_234 = arith.constant 3 : index
    %c4_235 = arith.constant 4 : index
    %c0_236 = arith.constant 0 : index
    %378 = vector.load %arg6[%c0_233, %c3_234, %c4_235, %c0_236] : memref<1x4x8x128xf32, #tpu.memory_space<vmem>>, vector<1x1x4x128xf32>
    %379 = vector.shape_cast %378 : vector<1x1x4x128xf32> to vector<4x128xf32>
    %380 = vector.shape_cast %377 : vector<4x128xf32> to vector<1x1x4x128xf32>
    tpu.vector_store %arg6[%c0_233, %c3_234, %c4_235, %c0_236], %380 {strides = array<i32>} : memref<1x4x8x128xf32, #tpu.memory_space<vmem>>, vector<1x1x4x128xf32>,
    return
  }
  func.func @transform_0(%arg0: i32) -> (i32, i32, i32) {
    %c0_i32 = arith.constant 0 : i32
    %c0_i32_0 = arith.constant 0 : i32
    %c0_i32_1 = arith.constant 0 : i32
    return %arg0, %c0_i32, %c0_i32_0 : i32, i32, i32
  }
  func.func @transform_1(%arg0: i32) -> (i32, i32) {
    %c0_i32 = arith.constant 0 : i32
    %c0_i32_0 = arith.constant 0 : i32
    %c0_i32_1 = arith.constant 0 : i32
    return %c0_i32, %c0_i32_0 : i32, i32
  }
  func.func @transform_2(%arg0: i32) -> (i32, i32) {
    %c0_i32 = arith.constant 0 : i32
    %c0_i32_0 = arith.constant 0 : i32
    %c0_i32_1 = arith.constant 0 : i32
    return %c0_i32, %c0_i32_0 : i32, i32
  }
  func.func @transform_3(%arg0: i32) -> (i32, i32, i32) {
    %c0_i32 = arith.constant 0 : i32
    %c0_i32_0 = arith.constant 0 : i32
    %c0_i32_1 = arith.constant 0 : i32
    %c0_i32_2 = arith.constant 0 : i32
    return %c0_i32, %c0_i32_0, %c0_i32_1 : i32, i32, i32
  }
  func.func @transform_4(%arg0: i32) -> (i32, i32) {
    %c0_i32 = arith.constant 0 : i32
    %c0_i32_0 = arith.constant 0 : i32
    %c0_i32_1 = arith.constant 0 : i32
    return %c0_i32, %c0_i32_0 : i32, i32
  }
  func.func @transform_5(%arg0: i32) -> (i32, i32, i32, i32) {
    %c0_i32 = arith.constant 0 : i32
    %c0_i32_0 = arith.constant 0 : i32
    %c0_i32_1 = arith.constant 0 : i32
    %c0_i32_2 = arith.constant 0 : i32
    return %arg0, %c0_i32, %c0_i32_0, %c0_i32_1 : i32, i32, i32, i32
  }
}

</mosaic_0001>

<llo_original>
// kernel: tpu_custom_call.1
$region0: #{tpu_custom_call.1}
  #allocation0 [shape = 'u32[]', space=smem, size = 0x4, offset = 0x4, fixed_abs, tag = 'smem constant byte address 0x4 - core index']
  #allocation1 [shape = 'u32[144,128]{1,0:T(1,128)}', space=vmem, size = 0x12000, scoped, tag = 'internal scratch']
  #allocation2 [shape = 'bf16[16,146]{1,0:T(16,128)(2,1)}', space=vmem, size = 0x2000, scoped, tag = 'scratch operand']
  #allocation3 [shape = 'bf16[8,146]{1,0:T(8,128)(2,1)}', space=vmem, size = 0x1000, scoped, tag = 'scratch operand']
  %s0 = inlined_call_operand.hbm [shape: f32[1,16,146], index: 0, kind: input, shape index: {}]
  %s1 = inlined_call_operand.vmem [shape: bf16[8,64], index: 1, kind: input, shape index: {}]
  %s2 = inlined_call_operand.vmem [shape: f32[8,1], index: 2, kind: input, shape index: {}]
  %s3 = inlined_call_operand.vmem [shape: bf16[4,4,32], index: 3, kind: input, shape index: {}]
  %s4 = inlined_call_operand.vmem [shape: f32[4,1], index: 4, kind: input, shape index: {}]
  %s5 = inlined_call_operand.hbm [shape: f32[1,4,8,128], index: 5, kind: output, shape index: {}]
  %s6 = sld [smem:[#allocation0]]
  $region38: #{tpu_custom_call.1} parent=0
    _
  %s8 = ssub.s32 1, %s6
  %s9 = scalar_select 0, %s8, %s6
  $region1: #{tpu_custom_call.1} parent=0
    #allocation4 [shape = 'u8[16384]{0}', space=vmem, size = 0x4000, scoped, tag = 'input window, operand 0, single buffered']
    #allocation5 [shape = 's32[1]{0}', space=sflag, size = 0x4, scoped, tag = 'scoped memory for tpu_custom_call.1']
    #allocation6 [shape = 's32[1]{0}', space=sflag, size = 0x4, scoped, tag = 'scoped memory for tpu_custom_call.1']
    #allocation7 [shape = 'u8[16384]{0}', space=vmem, size = 0x4000, scoped, tag = 'output window, operand 0, single buffered']
    %10 = vsyncpa [#allocation5], 0
    %11 = vsyncpa [#allocation6], 0
    // Predicated region
    $region2: #{tpu_custom_call.1} parent=1 // pred_check
      _
    $region3: #{tpu_custom_call.1} parent=1 // pred_check_branch
      %13 = sbr.rel (0) target = $region5
    $region4: #{tpu_custom_call.1} parent=1 // pred_region
      %s15 = ssub.s32 512, 512
      %16 = vsyncadd [#allocation5], %s15
      %s17 = sshll.u32 [#allocation4], 4
      %s18 = int_to_ptr.vmem [resolvable:$true] %s17
      %23 = dma.hbm_to_vmem [thread:$0]  %s0, 512, %s18, [#allocation5], 256, 256, 16
    $region5: #{tpu_custom_call.1} parent=1 // pred_fallthru
      _
    // Predicated region
    $region6: #{tpu_custom_call.1} parent=1 // pred_check
      _
    $region7: #{tpu_custom_call.1} parent=1 // pred_check_branch
      %25 = sbr.rel (0) target = $region9
    $region8: #{tpu_custom_call.1} parent=1 // pred_region
      _
    $region9: #{tpu_custom_call.1} parent=1 // pred_fallthru
      _
    // Predicated region
    $region10: #{tpu_custom_call.1} parent=1 // pred_check
      _
    $region11: #{tpu_custom_call.1} parent=1 // pred_check_branch
      %27 = sbr.rel (0) target = $region13
    $region12: #{tpu_custom_call.1} parent=1 // pred_region
      _
    $region13: #{tpu_custom_call.1} parent=1 // pred_fallthru
      _
    // Predicated region
    $region14: #{tpu_custom_call.1} parent=1 // pred_check
      _
    $region15: #{tpu_custom_call.1} parent=1 // pred_check_branch
      %29 = sbr.rel (0) target = $region17
    $region16: #{tpu_custom_call.1} parent=1 // pred_region
      _
    $region17: #{tpu_custom_call.1} parent=1 // pred_fallthru
      _
    // Predicated region
    $region18: #{tpu_custom_call.1} parent=1 // pred_check
      _
    $region19: #{tpu_custom_call.1} parent=1 // pred_check_branch
      %31 = sbr.rel (0) target = $region21
    $region20: #{tpu_custom_call.1} parent=1 // pred_region
      _
    $region21: #{tpu_custom_call.1} parent=1 // pred_fallthru
      _
    // Predicated region
    $region22: #{tpu_custom_call.1} parent=1 // pred_check
      _
    $region23: #{tpu_custom_call.1} parent=1 // pred_check_branch
      %33 = sbr.rel (0) target = $region25
    $region24: #{tpu_custom_call.1} parent=1 // pred_region
      %34 = dma.done [#allocation5], 512
    $region25: #{tpu_custom_call.1} parent=1 // pred_fallthru
      _
    %v38 = vlaneseq
    %v39 = vand.u32 %v38, 127
    %v40 = vand.u32 %v39, 7
    %v41 = vshra.s32 %v39, 3
    %v42 = vand.u32 %v41, 7
    %vm43 = vcmp.ge.s32.totalorder %v42, 1
    %vm44 = vcmp.lt.s32.totalorder %v42, 7
    %vm45 = vcmp.ge.s32.totalorder %v40, 1
    %vm46 = vcmp.lt.s32.totalorder %v40, 7
    %vm47 = vmand %vm43, %vm45
    %vm48 = vmand %vm43, %vm46
    %vm49 = vmand %vm44, %vm45
    %vm50 = vmand %vm44, %vm46
    %p51 = scmp.eq.s32.totalorder 0, 0
    // Predicated region
    $region26: #{tpu_custom_call.1} parent=1 // pred_check
      %p52 = pneg %p51
    $region27: #{tpu_custom_call.1} parent=1 // pred_check_branch
      %54 = sbr.rel (%p52) target = $region29
    $region28: #{tpu_custom_call.1} parent=1 // pred_region
      %vm55 = vcmask 68608
      %56 = vst.msk [vmem:[#allocation3] sm:$0xf] %vm55, 0
      %vm57 = vcmask 142408
      %58 = vst.msk [vmem:[#allocation3 + $0x4] sm:$0xf] %vm57, 0
    $region29: #{tpu_custom_call.1} parent=1 // pred_fallthru
      _
    %v59 = vld [vmem:[#allocation4] sm:$0xff]
    %v60 = vld [vmem:[#allocation4 + $0x8] sm:$0xff]
    %v61 = vld [vmem:[#allocation4 + $0x10] sm:$0xff]
    %v62 = vld [vmem:[#allocation4 + $0x18] sm:$0xff]
    %vm63 = vcmp.ge.f32.partialorder %v59, 0.0
    %vm64 = vcmp.ge.f32.partialorder %v60, 0.0
    %vm65 = vcmp.ge.f32.partialorder %v61, 0.0
    %vm66 = vcmp.ge.f32.partialorder %v62, 0.0
    %v67 = vmul.f32 %v59, 0.2
    %v68 = vmul.f32 %v60, 0.2
    %v69 = vmul.f32 %v61, 0.2
    %v70 = vmul.f32 %v62, 0.2
    %v71 = vsel %vm63, %v59, %v67
    %v72 = vsel %vm64, %v60, %v68
    %v73 = vsel %vm65, %v61, %v69
    %v74 = vsel %vm66, %v62, %v70
    %v75 = vpack.c.bf16 %v73, %v71
    %v76 = vpack.c.bf16 %v74, %v72
    %77 = vst [vmem:[#allocation2] sm:$0xff] %v75
    %vm78 = vcmask 146432
    %79 = vst.msk [vmem:[#allocation2 + $0x8] sm:$0xff] %vm78, %v76
    %v80 = vld [vmem:[#allocation2] sm:$0x3]
    %v81 = vld [vmem:[#allocation2 + $0x8] sm:$0x3]
    %v82 = vsel %vm46, 1, 0
    %vm83 = vcmp.eq.s32.totalorder %v82, 1
    %vm84 = vmpackc.low %vm83, %vm83
    %v85 = vsel %vm84, 65537, 0
    %v86 = vlaneseq
    %v87 = vshrl.u32 %v86, 7
    %v88 = vsub.s32 0, %v87
    %v89 = vrot.slane %v85, %v88
    %90 = vrot.lane.b32.xlu0 %v89, 10
    %v91 = vpop.permute.xlu0 %90
    %vm92 = vcmp.ne.s16.totalorder %v91, 0
    %v93 = vsel %vm92, %v80, 0
    %v94 = vsel %vm92, %v81, 0
    %v95 = vsel %vm44, 1, 0
    %vm96 = vcmp.eq.s32.totalorder %v95, 1
    %vm97 = vmpackc.low %vm96, %vm96
    %v98 = vsel %vm97, 65537, 0
    %v99 = vlaneseq
    %v100 = vshrl.u32 %v99, 7
    %v101 = vsub.s32 0, %v100
    %v102 = vrot.slane %v98, %v101
    %103 = vrot.lane.b32.xlu0 %v102, 17
    %v104 = vpop.permute.xlu0 %103
    %vm105 = vcmp.ne.s16.totalorder %v104, 0
    %v106 = vsel %vm105, %v80, 0
    %v107 = vsel %vm105, %v81, 0
    %v108 = vsel %vm50, 1, 0
    %vm109 = vcmp.eq.s32.totalorder %v108, 1
    %vm110 = vmpackc.low %vm109, %vm109
    %v111 = vsel %vm110, 65537, 0
    %v112 = vlaneseq
    %v113 = vshrl.u32 %v112, 7
    %v114 = vsub.s32 0, %v113
    %v115 = vrot.slane %v111, %v114
    %116 = vrot.lane.b32.xlu0 %v115, 18
    %v117 = vpop.permute.xlu0 %116
    %vm118 = vcmp.ne.s16.totalorder %v117, 0
    %v119 = vsel %vm118, %v80, 0
    %v120 = vsel %vm118, %v81, 0
    %v121 = vld [vmem:[#allocation2] sm:$0xc]
    %v122 = vld [vmem:[#allocation2 + $0x8] sm:$0xc]
    %v123 = vsel %vm45, 1, 0
    %vm124 = vcmp.eq.s32.totalorder %v123, 1
    %vm125 = vmpackc.low %vm124, %vm124
    %v126 = vsel %vm125, 65537, 0
    %v127 = vlaneseq
    %v128 = vshrl.u32 %v127, 7
    %v129 = vsub.s32 0, %v128
    %v130 = vrot.slane %v126, %v129
    %131 = vrot.lane.b32.xlu0 %v130, 8
    %v132 = vpop.permute.xlu0 %131
    %vm133 = vcmp.ne.s16.totalorder %v132, 0
    %v134 = vsel %vm133, %v121, 0
    %v135 = vsel %vm133, %v122, 0
    %v136 = vsel %vm49, 1, 0
    %vm137 = vcmp.eq.s32.totalorder %v136, 1
    %vm138 = vmpackc.low %vm137, %vm137
    %v139 = vsel %vm138, 65537, 0
    %v140 = vlaneseq
    %v141 = vshrl.u32 %v140, 7
    %v142 = vsub.s32 0, %v141
    %v143 = vrot.slane %v139, %v142
    %144 = vrot.lane.b32.xlu0 %v143, 16
    %v145 = vpop.permute.xlu0 %144
    %vm146 = vcmp.ne.s16.totalorder %v145, 0
    %v147 = vsel %vm146, %v121, 0
    %v148 = vsel %vm146, %v122, 0
    %v149 = vsel %vm105, %v121, 0
    %v150 = vsel %vm105, %v122, 0
    %v151 = vld [vmem:[#allocation2] sm:$0x30]
    %v152 = vld [vmem:[#allocation2 + $0x8] sm:$0x30]
    %v153 = vsel %vm43, 1, 0
    %vm154 = vcmp.eq.s32.totalorder %v153, 1
    %vm155 = vmpackc.low %vm154, %vm154
    %v156 = vsel %vm155, 65537, 0
    %v157 = vlaneseq
    %v158 = vshrl.u32 %v157, 7
    %v159 = vsub.s32 0, %v158
    %v160 = vrot.slane %v156, %v159
    %161 = vrot.lane.b32.xlu0 %v160, 1
    %v162 = vpop.permute.xlu0 %161
    %vm163 = vcmp.ne.s16.totalorder %v162, 0
    %v164 = vsel %vm163, %v151, 0
    %v165 = vsel %vm163, %v152, 0
    %v166 = vsel %vm48, 1, 0
    %vm167 = vcmp.eq.s32.totalorder %v166, 1
    %vm168 = vmpackc.low %vm167, %vm167
    %v169 = vsel %vm168, 65537, 0
    %v170 = vlaneseq
    %v171 = vshrl.u32 %v170, 7
    %v172 = vsub.s32 0, %v171
    %v173 = vrot.slane %v169, %v172
    %174 = vrot.lane.b32.xlu0 %v173, 2
    %v175 = vpop.permute.xlu0 %174
    %vm176 = vcmp.ne.s16.totalorder %v175, 0
    %v177 = vsel %vm176, %v151, 0
    %v178 = vsel %vm176, %v152, 0
    %v179 = vsel %vm92, %v151, 0
    %v180 = vsel %vm92, %v152, 0
    %v181 = vld [vmem:[#allocation2] sm:$0xc0]
    %v182 = vsel %vm47, 1, 0
    %vm183 = vcmp.eq.s32.totalorder %v182, 1
    %vm184 = vmpackc.low %vm183, %vm183
    %v185 = vsel %vm184, %v181, 0
    %v186 = vld [vmem:[#allocation2 + $0x8] sm:$0xc0]
    %v187 = vsel %vm163, %v181, 0
    %v188 = vsel %vm163, %v186, 0
    %v189 = vsel %vm133, %v181, 0
    %v190 = vsel %vm133, %v186, 0
    %v193 = vrot.slane %v93, 6
    %v194 = vrot.slane %v94, 6
    %195 = vrot.lane.b32.xlu0 %v193, 127
    %v196 = vpop.permute.xlu0 %195
    %197 = vrot.lane.b32.xlu0 %v194, 127
    %v198 = vpop.permute.xlu0 %197
    %vm199 = vcmask 1039360
    %v200 = vsel %vm199, %v196, %v198
    %v203 = vrot.slane %v106, 4
    %v204 = vrot.slane %v107, 4
    %205 = vrot.lane.b32.xlu0 %v203, 120
    %v206 = vpop.permute.xlu0 %205
    %207 = vrot.lane.b32.xlu0 %v204, 120
    %v208 = vpop.permute.xlu0 %207
    %vm209 = vcmask 982016
    %v210 = vsel %vm209, %v206, %v208
    %v213 = vrot.slane %v119, 2
    %v214 = vrot.slane %v120, 2
    %215 = vrot.lane.b32.xlu0 %v213, 119
    %v216 = vpop.permute.xlu0 %215
    %217 = vrot.lane.b32.xlu0 %v214, 119
    %v218 = vpop.permute.xlu0 %217
    %vm219 = vcmask 973824
    %v220 = vsel %vm219, %v216, %v218
    %v223 = vrot.slane %v134, 2
    %v224 = vrot.slane %v135, 2
    %225 = vrot.lane.b32.xlu0 %v223, 1
    %v226 = vpop.permute.xlu0 %225
    %227 = vrot.lane.b32.xlu0 %v224, 1
    %v228 = vpop.permute.xlu0 %227
    %vm229 = vcmask 7168
    %v230 = vsel %vm229, %v226, %v228
    %v233 = vrot.slane %v147, 6
    %v234 = vrot.slane %v148, 6
    %235 = vrot.lane.b32.xlu0 %v233, 121
    %v236 = vpop.permute.xlu0 %235
    %237 = vrot.lane.b32.xlu0 %v234, 121
    %v238 = vpop.permute.xlu0 %237
    %vm239 = vcmask 990208
    %v240 = vsel %vm239, %v236, %v238
    %v243 = vrot.slane %v149, 4
    %v244 = vrot.slane %v150, 4
    %245 = vrot.lane.b32.xlu0 %v243, 120
    %v246 = vpop.permute.xlu0 %245
    %247 = vrot.lane.b32.xlu0 %v244, 120
    %v248 = vpop.permute.xlu0 %247
    %v249 = vsel %vm209, %v246, %v248
    %v252 = vrot.slane %v164, 4
    %v253 = vrot.slane %v165, 4
    %254 = vrot.lane.b32.xlu0 %v252, 8
    %v255 = vpop.permute.xlu0 %254
    %256 = vrot.lane.b32.xlu0 %v253, 8
    %v257 = vpop.permute.xlu0 %256
    %vm258 = vcmask 64512
    %v259 = vsel %vm258, %v255, %v257
    %v262 = vrot.slane %v177, 2
    %v263 = vrot.slane %v178, 2
    %264 = vrot.lane.b32.xlu0 %v262, 7
    %v265 = vpop.permute.xlu0 %264
    %266 = vrot.lane.b32.xlu0 %v263, 7
    %v267 = vpop.permute.xlu0 %266
    %vm268 = vcmask 56320
    %v269 = vsel %vm268, %v265, %v267
    %v272 = vrot.slane %v179, 6
    %v273 = vrot.slane %v180, 6
    %274 = vrot.lane.b32.xlu0 %v272, 127
    %v275 = vpop.permute.xlu0 %274
    %276 = vrot.lane.b32.xlu0 %v273, 127
    %v277 = vpop.permute.xlu0 %276
    %v278 = vsel %vm199, %v275, %v277
    %v280 = vrot.slane %v185, 6
    %281 = vrot.lane.b32.xlu0 %v280, 9
    %v282 = vpop.permute.xlu0 %281
    %v285 = vrot.slane %v187, 4
    %v286 = vrot.slane %v188, 4
    %287 = vrot.lane.b32.xlu0 %v285, 8
    %v288 = vpop.permute.xlu0 %287
    %289 = vrot.lane.b32.xlu0 %v286, 8
    %v290 = vpop.permute.xlu0 %289
    %v291 = vsel %vm258, %v288, %v290
    %v294 = vrot.slane %v189, 2
    %v295 = vrot.slane %v190, 2
    %296 = vrot.lane.b32.xlu0 %v294, 1
    %v297 = vpop.permute.xlu0 %296
    %298 = vrot.lane.b32.xlu0 %v295, 1
    %v299 = vpop.permute.xlu0 %298
    %v300 = vsel %vm229, %v297, %v299
    %vm301 = vcmask 1041408
    %v304 = vsel %vm301, %v80, %v200
    %v307 = vsel %vm301, %v81, %v198
    %vm308 = vcmask 1043456
    %v310 = vsel %vm308, %v304, %v210
    %v312 = vsel %vm308, %v307, %v208
    %vm313 = vcmask 1045504
    %v315 = vsel %vm313, %v310, %v220
    %v317 = vsel %vm313, %v312, %v218
    %v320 = vsel %vm301, %v226, %v121
    %v323 = vsel %vm301, %v230, %v122
    %v325 = vsel %vm308, %v320, %v240
    %v327 = vsel %vm308, %v323, %v238
    %v329 = vsel %vm313, %v325, %v249
    %v331 = vsel %vm313, %v327, %v248
    %v334 = vsel %vm301, %v255, %v265
    %v337 = vsel %vm301, %v259, %v269
    %v339 = vsel %vm308, %v334, %v151
    %v341 = vsel %vm308, %v337, %v152
    %v343 = vsel %vm313, %v339, %v278
    %v345 = vsel %vm313, %v341, %v277
    %v348 = vsel %vm301, %v282, %v288
    %v350 = vsel %vm301, %v282, %v291
    %v352 = vsel %vm308, %v348, %v297
    %v354 = vsel %vm308, %v350, %v300
    %v356 = vsel %vm313, %v352, %v181
    %v358 = vsel %vm313, %v354, %v186
    %v359 = vld [vmem:[%s1] sm:$0xf]
    %v360 = vld [vmem:[%s2] sm:$0xff]
    %362 = vset.pattern.permute.xlu0 0
    %363 = vperm.xlu0 %362, %v360
    %v364 = vpop.permute.xlu0 %363
    %374 = vrot.lane.b32.xlu0 %v315, 119
    %v375 = vpop.permute.xlu0 %374
    %376 = vrot.lane.b32.xlu0 %v317, 119
    %v377 = vpop.permute.xlu0 %376
    %378 = vrot.lane.b32.xlu0 %v329, 119
    %v379 = vpop.permute.xlu0 %378
    %380 = vrot.lane.b32.xlu0 %v331, 119
    %v381 = vpop.permute.xlu0 %380
    %382 = vrot.lane.b32.xlu0 %v343, 119
    %v383 = vpop.permute.xlu0 %382
    %384 = vrot.lane.b32.xlu0 %v345, 119
    %v385 = vpop.permute.xlu0 %384
    %386 = vrot.lane.b32.xlu0 %v356, 119
    %v387 = vpop.permute.xlu0 %386
    %388 = vrot.lane.b32.xlu0 %v358, 119
    %v389 = vpop.permute.xlu0 %388
    %v390 = vsel %vm219, %v375, %v377
    %v391 = vsel %vm219, %v379, %v381
    %v392 = vsel %vm219, %v383, %v385
    %v393 = vsel %vm219, %v387, %v389
    %vm398 = vcmask 523264
    %v400 = vsel %vm398, %v359, 0
    %402 = vmatprep.subr.bf16.mxu0 0
    %403 = vmatpush1.bf16.msra.mxu0 %v390
    %404 = vmatprep.subr.bf16.mxu0 0
    %405 = vmatpush1.bf16.msra.mxu0 %v391
    %406 = vmatprep.subr.bf16.mxu0 0
    %407 = vmatpush1.bf16.msra.mxu0 %v392
    %408 = vmatprep.subr.bf16.mxu0 0
    %409 = vmatpush1.bf16.msra.mxu0 %v393
    %410 = vmatprep.subr.bf16.mxu0 0
    %411 = vmatpush1.bf16.msra.mxu0 0
    %412 = vmatprep.subr.bf16.mxu0 0
    %413 = vmatpush1.bf16.msra.mxu0 0
    %414 = vmatprep.subr.bf16.mxu0 0
    %415 = vmatpush1.bf16.msra.mxu0 0
    %416 = vmatprep.subr.bf16.mxu0 0
    %417 = vmatpush1.bf16.msra.mxu0 0
    %418 = vmatprep.subr.bf16.mxu0 0
    %419 = vmatpush1.bf16.msra.mxu0 0
    %420 = vmatprep.subr.bf16.mxu0 0
    %421 = vmatpush1.bf16.msra.mxu0 0
    %422 = vmatprep.subr.bf16.mxu0 0
    %423 = vmatpush1.bf16.msra.mxu0 0
    %424 = vmatprep.subr.bf16.mxu0 0
    %425 = vmatpush1.bf16.msra.mxu0 0
    %426 = vmatprep.subr.bf16.mxu0 0
    %427 = vmatpush1.bf16.msra.mxu0 0
    %428 = vmatprep.subr.bf16.mxu0 0
    %429 = vmatpush1.bf16.msra.mxu0 0
    %430 = vmatprep.subr.bf16.mxu0 0
    %431 = vmatpush1.bf16.msra.mxu0 0
    %432 = vmatprep.subr.bf16.mxu0 0
    %433 = vmatpush1.bf16.msra.mxu0 0
    %434 = vmatprep.mubr.bf16.mxu0 0
    %435 = vmatmul.mubr.bf16.gmra.mrb[0].mxu0 %v400
    %v436 = vpop.f32.mrb[0].mxu0
    %v437 = vadd.f32 %v364, %v436
    %v438 = vpop.f32.mrb[0].mxu0
    %v439 = vpop.f32.mrb[0].mxu0
    %v440 = vpop.f32.mrb[0].mxu0
    %441 = vdwg.mxu0
    %v442 = vmax.f32 %v437, 0.0
    %v443 = vpack.c.bf16 %v442, %v442
    %v445 = vunpack.c.l.b16 %v443
    %v446 = vpack.c.b16 %v445, %v445
    %447 = vrot.lane.b32.xlu0 %v446, 9
    %v448 = vpop.permute.xlu0 %447
    %v449 = vrot.slane %v448, 4
    %vm450 = vcmask 72704
    %v451 = vsel %vm450, %v449, %v448
    %vm453 = vcmask 1043528
    %vm454 = vcmask 72708
    %vm455 = vmor %vm454, %vm453
    %456 = vst.msk [vmem:[#allocation3] sm:$0xff] %vm455, %v451
    %v457 = vld [vmem:[#allocation3] sm:$0xf]
    %v458 = vsel %vm184, %v457, 0
    %v459 = vld [vmem:[#allocation3] sm:$0xff]
    %460 = vrot.lane.b32.xlu0 %v156, 1
    %v461 = vpop.permute.xlu0 %460
    %v462 = vrot.slane %v461, 4
    %v463 = vsel %vm229, %v462, %v461
    %vm464 = vcmp.ne.s16.totalorder %v463, 0
    %v465 = vsel %vm464, %v459, 0
    %466 = vrot.lane.b32.xlu0 %v126, 8
    %v467 = vpop.permute.xlu0 %466
    %v468 = vrot.slane %v467, 4
    %v469 = vsel %vm258, %v468, %v467
    %vm470 = vcmp.ne.s16.totalorder %v469, 0
    %v471 = vsel %vm470, %v459, 0
    %v473 = vunpack.c.l.b16 %v465
    %v474 = vunpack.c.h.b16 %v465
    %v475 = vpack.c.b16 %v473, %v473
    %v476 = vpack.c.b16 %v474, %v474
    %477 = vrot.lane.b32.xlu0 %v475, 127
    %v478 = vpop.permute.xlu0 %477
    %479 = vrot.lane.b32.xlu0 %v476, 127
    %v480 = vpop.permute.xlu0 %479
    %v481 = vsel %vm199, %v478, %v480
    %v483 = vunpack.c.l.b16 %v471
    %v484 = vunpack.c.h.b16 %v471
    %v485 = vpack.c.b16 %v483, %v483
    %v486 = vpack.c.b16 %v484, %v484
    %487 = vrot.lane.b32.xlu0 %v485, 120
    %v488 = vpop.permute.xlu0 %487
    %489 = vrot.lane.b32.xlu0 %v486, 120
    %v490 = vpop.permute.xlu0 %489
    %v491 = vsel %vm209, %v488, %v490
    %v493 = vunpack.c.l.b16 %v459
    %v494 = vunpack.c.h.b16 %v459
    %v495 = vpack.c.b16 %v493, %v493
    %v496 = vpack.c.b16 %v494, %v494
    %497 = vrot.lane.b32.xlu0 %v495, 119
    %v498 = vpop.permute.xlu0 %497
    %499 = vrot.lane.b32.xlu0 %v496, 119
    %v500 = vpop.permute.xlu0 %499
    %v501 = vsel %vm219, %v498, %v500
    %v504 = vsel %vm308, %v458, %v481
    %v508 = vsel %vm308, %v491, %v501
    %v510 = vld [vmem:[%s3] sm:$0x3]
    %v511 = vld [vmem:[%s4] sm:$0xf]
    %513 = vset.pattern.permute.xlu0 0
    %514 = vperm.xlu0 %513, %v511
    %v515 = vpop.permute.xlu0 %514
    %vm517 = vcmask 261120
    %v519 = vsel %vm517, %v510, 0
    %521 = vmatprep.subr.bf16.mxu0 0
    %522 = vmatpush1.bf16.msra.mxu0 %v504
    %523 = vmatprep.subr.bf16.mxu0 0
    %524 = vmatpush1.bf16.msra.mxu0 %v508
    %525 = vmatprep.subr.bf16.mxu0 0
    %526 = vmatpush1.bf16.msra.mxu0 0
    %527 = vmatprep.subr.bf16.mxu0 0
    %528 = vmatpush1.bf16.msra.mxu0 0
    %529 = vmatprep.subr.bf16.mxu0 0
    %530 = vmatpush1.bf16.msra.mxu0 0
    %531 = vmatprep.subr.bf16.mxu0 0
    %532 = vmatpush1.bf16.msra.mxu0 0
    %533 = vmatprep.subr.bf16.mxu0 0
    %534 = vmatpush1.bf16.msra.mxu0 0
    %535 = vmatprep.subr.bf16.mxu0 0
    %536 = vmatpush1.bf16.msra.mxu0 0
    %537 = vmatprep.subr.bf16.mxu0 0
    %538 = vmatpush1.bf16.msra.mxu0 0
    %539 = vmatprep.subr.bf16.mxu0 0
    %540 = vmatpush1.bf16.msra.mxu0 0
    %541 = vmatprep.subr.bf16.mxu0 0
    %542 = vmatpush1.bf16.msra.mxu0 0
    %543 = vmatprep.subr.bf16.mxu0 0
    %544 = vmatpush1.bf16.msra.mxu0 0
    %545 = vmatprep.subr.bf16.mxu0 0
    %546 = vmatpush1.bf16.msra.mxu0 0
    %547 = vmatprep.subr.bf16.mxu0 0
    %548 = vmatpush1.bf16.msra.mxu0 0
    %549 = vmatprep.subr.bf16.mxu0 0
    %550 = vmatpush1.bf16.msra.mxu0 0
    %551 = vmatprep.subr.bf16.mxu0 0
    %552 = vmatpush1.bf16.msra.mxu0 0
    %553 = vmatprep.mubr.bf16.mxu0 0
    %554 = vmatmul.mubr.bf16.gmra.mrb[0].mxu0 %v519
    %v555 = vpop.f32.mrb[0].mxu0
    %v556 = vadd.f32 %v515, %v555
    %v557 = vpop.f32.mrb[0].mxu0
    %v558 = vpop.f32.mrb[0].mxu0
    %v559 = vpop.f32.mrb[0].mxu0
    %560 = vdwg.mxu0
    %561 = vst [vmem:[#allocation7 + $0x4] sm:$0xf] %v556
    %v562 = vld [vmem:[#allocation4] sm:$0xf]
    %v563 = vld [vmem:[#allocation4 + $0x8] sm:$0xf]
    %566 = vrot.lane.b32.xlu0 %v562, 119
    %v567 = vpop.permute.xlu0 %566
    %568 = vrot.lane.b32.xlu0 %v563, 119
    %v569 = vpop.permute.xlu0 %568
    %vm570 = vcmask 973824
    %v571 = vsel %vm570, %v567, %v569
    %573 = vst [vmem:[#allocation7] sm:$0xf] %v571
    %vm574 = vcmask 519168
    %v575 = vsel %vm574, %v556, 0.0
    %576 = vadd.xlane.f32.xlu0 %v575
    %v577 = vpop.xlane.xlu0 %576
    %v578 = vadd.f32 %v577, 0.0
    %580 = vrot.lane.b32.xlu0 %v556, 64
    %v581 = vpop.permute.xlu0 %580
    %v583 = vsel %vm574, %v581, 0.0
    %584 = vadd.xlane.f32.xlu0 %v583
    %v585 = vpop.xlane.xlu0 %584
    %v586 = vadd.f32 %v585, 0.0
    %v587 = vld [vmem:[#allocation3] sm:$0xff]
    %v588 = vsel %vm464, %v587, 0
    %589 = vrot.lane.b32.xlu0 %v169, 2
    %v590 = vpop.permute.xlu0 %589
    %v591 = vrot.slane %v590, 4
    %vm592 = vcmask 15360
    %v593 = vsel %vm592, %v591, %v590
    %vm594 = vcmp.ne.s16.totalorder %v593, 0
    %v595 = vsel %vm594, %v587, 0
    %596 = vrot.lane.b32.xlu0 %v85, 10
    %v597 = vpop.permute.xlu0 %596
    %v598 = vrot.slane %v597, 4
    %vm599 = vcmask 80896
    %v600 = vsel %vm599, %v598, %v597
    %vm601 = vcmp.ne.s16.totalorder %v600, 0
    %v602 = vsel %vm601, %v587, 0
    %v604 = vunpack.c.l.b16 %v588
    %v605 = vunpack.c.h.b16 %v588
    %v606 = vpack.c.b16 %v604, %v604
    %v607 = vpack.c.b16 %v605, %v605
    %v609 = vunpack.c.l.b16 %v595
    %v610 = vunpack.c.h.b16 %v595
    %v611 = vpack.c.b16 %v609, %v609
    %v612 = vpack.c.b16 %v610, %v610
    %613 = vrot.lane.b32.xlu0 %v611, 127
    %v614 = vpop.permute.xlu0 %613
    %615 = vrot.lane.b32.xlu0 %v612, 127
    %v616 = vpop.permute.xlu0 %615
    %v617 = vsel %vm199, %v614, %v616
    %v619 = vunpack.c.l.b16 %v587
    %v620 = vunpack.c.h.b16 %v587
    %v621 = vpack.c.b16 %v619, %v619
    %v622 = vpack.c.b16 %v620, %v620
    %623 = vrot.lane.b32.xlu0 %v621, 120
    %v624 = vpop.permute.xlu0 %623
    %625 = vrot.lane.b32.xlu0 %v622, 120
    %v626 = vpop.permute.xlu0 %625
    %v627 = vsel %vm209, %v624, %v626
    %v629 = vunpack.c.l.b16 %v602
    %v630 = vunpack.c.h.b16 %v602
    %v631 = vpack.c.b16 %v629, %v629
    %v632 = vpack.c.b16 %v630, %v630
    %633 = vrot.lane.b32.xlu0 %v631, 119
    %v634 = vpop.permute.xlu0 %633
    %635 = vrot.lane.b32.xlu0 %v632, 119
    %v636 = vpop.permute.xlu0 %635
    %v637 = vsel %vm219, %v634, %v636
    %v640 = vsel %vm308, %v606, %v617
    %v643 = vsel %vm308, %v607, %v616
    %v646 = vsel %vm308, %v627, %v637
    %v649 = vsel %vm308, %v626, %v636
    %s650 = scalar_lea.vmem %s3, 2
    %v651 = vld [vmem:[%s650] sm:$0x3]
    %v652 = vld [vmem:[%s4] sm:$0xf]
    %654 = vset.pattern.permute.xlu0 0
    %655 = vperm.xlu0 %654, %v652
    %v656 = vpop.permute.xlu0 %655
    %662 = vrot.lane.b32.xlu0 %v640, 127
    %v663 = vpop.permute.xlu0 %662
    %664 = vrot.lane.b32.xlu0 %v643, 127
    %v665 = vpop.permute.xlu0 %664
    %666 = vrot.lane.b32.xlu0 %v646, 127
    %v667 = vpop.permute.xlu0 %666
    %668 = vrot.lane.b32.xlu0 %v649, 127
    %v669 = vpop.permute.xlu0 %668
    %v670 = vsel %vm199, %v663, %v665
    %v671 = vsel %vm199, %v667, %v669
    %v675 = vsel %vm517, %v651, 0
    %677 = vmatprep.subr.bf16.mxu0 0
    %678 = vmatpush1.bf16.msra.mxu0 %v670
    %679 = vmatprep.subr.bf16.mxu0 0
    %680 = vmatpush1.bf16.msra.mxu0 %v671
    %681 = vmatprep.subr.bf16.mxu0 0
    %682 = vmatpush1.bf16.msra.mxu0 0
    %683 = vmatprep.subr.bf16.mxu0 0
    %684 = vmatpush1.bf16.msra.mxu0 0
    %685 = vmatprep.subr.bf16.mxu0 0
    %686 = vmatpush1.bf16.msra.mxu0 0
    %687 = vmatprep.subr.bf16.mxu0 0
    %688 = vmatpush1.bf16.msra.mxu0 0
    %689 = vmatprep.subr.bf16.mxu0 0
    %690 = vmatpush1.bf16.msra.mxu0 0
    %691 = vmatprep.subr.bf16.mxu0 0
    %692 = vmatpush1.bf16.msra.mxu0 0
    %693 = vmatprep.subr.bf16.mxu0 0
    %694 = vmatpush1.bf16.msra.mxu0 0
    %695 = vmatprep.subr.bf16.mxu0 0
    %696 = vmatpush1.bf16.msra.mxu0 0
    %697 = vmatprep.subr.bf16.mxu0 0
    %698 = vmatpush1.bf16.msra.mxu0 0
    %699 = vmatprep.subr.bf16.mxu0 0
    %700 = vmatpush1.bf16.msra.mxu0 0
    %701 = vmatprep.subr.bf16.mxu0 0
    %702 = vmatpush1.bf16.msra.mxu0 0
    %703 = vmatprep.subr.bf16.mxu0 0
    %704 = vmatpush1.bf16.msra.mxu0 0
    %705 = vmatprep.subr.bf16.mxu0 0
    %706 = vmatpush1.bf16.msra.mxu0 0
    %707 = vmatprep.subr.bf16.mxu0 0
    %708 = vmatpush1.bf16.msra.mxu0 0
    %709 = vmatprep.mubr.bf16.mxu0 0
    %710 = vmatmul.mubr.bf16.gmra.mrb[0].mxu0 %v675
    %v711 = vpop.f32.mrb[0].mxu0
    %v712 = vadd.f32 %v656, %v711
    %v713 = vpop.f32.mrb[0].mxu0
    %v714 = vpop.f32.mrb[0].mxu0
    %v715 = vpop.f32.mrb[0].mxu0
    %716 = vdwg.mxu0
    %s717 = scalar_lea.vmem [#allocation7], 8
    %718 = vst [vmem:[%s717 + $0x4] sm:$0xf] %v712
    %v719 = vld [vmem:[#allocation4] sm:$0xf0]
    %v720 = vld [vmem:[#allocation4 + $0x8] sm:$0xf0]
    %723 = vrot.lane.b32.xlu0 %v719, 119
    %v724 = vpop.permute.xlu0 %723
    %725 = vrot.lane.b32.xlu0 %v720, 119
    %v726 = vpop.permute.xlu0 %725
    %v727 = vsel %vm570, %v724, %v726
    %729 = vst [vmem:[%s717 - $0x4] sm:$0xf0] %v727
    %v730 = vsel %vm574, %v712, 0.0
    %731 = vadd.xlane.f32.xlu0 %v730
    %v732 = vpop.xlane.xlu0 %731
    %v733 = vadd.f32 %v578, %v732
    %735 = vrot.lane.b32.xlu0 %v712, 64
    %v736 = vpop.permute.xlu0 %735
    %v738 = vsel %vm574, %v736, 0.0
    %739 = vadd.xlane.f32.xlu0 %v738
    %v740 = vpop.xlane.xlu0 %739
    %v741 = vadd.f32 %v586, %v740
    %v742 = vld [vmem:[#allocation3] sm:$0xff]
    %v743 = vsel %vm470, %v742, 0
    %744 = vrot.lane.b32.xlu0 %v139, 16
    %v745 = vpop.permute.xlu0 %744
    %v746 = vrot.slane %v745, 4
    %vm747 = vcmask 130048
    %v748 = vsel %vm747, %v746, %v745
    %vm749 = vcmp.ne.s16.totalorder %v748, 0
    %v750 = vsel %vm749, %v742, 0
    %751 = vrot.lane.b32.xlu0 %v98, 17
    %v752 = vpop.permute.xlu0 %751
    %v753 = vrot.slane %v752, 4
    %vm754 = vcmask 138240
    %v755 = vsel %vm754, %v753, %v752
    %vm756 = vcmp.ne.s16.totalorder %v755, 0
    %v757 = vsel %vm756, %v742, 0
    %v759 = vunpack.c.l.b16 %v743
    %v760 = vunpack.c.h.b16 %v743
    %v761 = vpack.c.b16 %v759, %v759
    %v762 = vpack.c.b16 %v760, %v760
    %v764 = vunpack.c.l.b16 %v742
    %v765 = vunpack.c.h.b16 %v742
    %v766 = vpack.c.b16 %v764, %v764
    %v767 = vpack.c.b16 %v765, %v765
    %768 = vrot.lane.b32.xlu0 %v766, 127
    %v769 = vpop.permute.xlu0 %768
    %770 = vrot.lane.b32.xlu0 %v767, 127
    %v771 = vpop.permute.xlu0 %770
    %v772 = vsel %vm199, %v769, %v771
    %v774 = vunpack.c.l.b16 %v750
    %v775 = vunpack.c.h.b16 %v750
    %v776 = vpack.c.b16 %v774, %v774
    %v777 = vpack.c.b16 %v775, %v775
    %778 = vrot.lane.b32.xlu0 %v776, 120
    %v779 = vpop.permute.xlu0 %778
    %780 = vrot.lane.b32.xlu0 %v777, 120
    %v781 = vpop.permute.xlu0 %780
    %v782 = vsel %vm209, %v779, %v781
    %v784 = vunpack.c.l.b16 %v757
    %v785 = vunpack.c.h.b16 %v757
    %v786 = vpack.c.b16 %v784, %v784
    %v787 = vpack.c.b16 %v785, %v785
    %788 = vrot.lane.b32.xlu0 %v786, 119
    %v789 = vpop.permute.xlu0 %788
    %790 = vrot.lane.b32.xlu0 %v787, 119
    %v791 = vpop.permute.xlu0 %790
    %v792 = vsel %vm219, %v789, %v791
    %v795 = vsel %vm308, %v761, %v772
    %v798 = vsel %vm308, %v762, %v771
    %v801 = vsel %vm308, %v782, %v792
    %v804 = vsel %vm308, %v781, %v791
    %s805 = scalar_lea.vmem %s3, 4
    %v806 = vld [vmem:[%s805] sm:$0x3]
    %v807 = vld [vmem:[%s4] sm:$0xf]
    %809 = vset.pattern.permute.xlu0 0
    %810 = vperm.xlu0 %809, %v807
    %v811 = vpop.permute.xlu0 %810
    %817 = vrot.lane.b32.xlu0 %v795, 120
    %v818 = vpop.permute.xlu0 %817
    %819 = vrot.lane.b32.xlu0 %v798, 120
    %v820 = vpop.permute.xlu0 %819
    %821 = vrot.lane.b32.xlu0 %v801, 120
    %v822 = vpop.permute.xlu0 %821
    %823 = vrot.lane.b32.xlu0 %v804, 120
    %v824 = vpop.permute.xlu0 %823
    %v825 = vsel %vm209, %v818, %v820
    %v826 = vsel %vm209, %v822, %v824
    %v830 = vsel %vm517, %v806, 0
    %832 = vmatprep.subr.bf16.mxu0 0
    %833 = vmatpush1.bf16.msra.mxu0 %v825
    %834 = vmatprep.subr.bf16.mxu0 0
    %835 = vmatpush1.bf16.msra.mxu0 %v826
    %836 = vmatprep.subr.bf16.mxu0 0
    %837 = vmatpush1.bf16.msra.mxu0 0
    %838 = vmatprep.subr.bf16.mxu0 0
    %839 = vmatpush1.bf16.msra.mxu0 0
    %840 = vmatprep.subr.bf16.mxu0 0
    %841 = vmatpush1.bf16.msra.mxu0 0
    %842 = vmatprep.subr.bf16.mxu0 0
    %843 = vmatpush1.bf16.msra.mxu0 0
    %844 = vmatprep.subr.bf16.mxu0 0
    %845 = vmatpush1.bf16.msra.mxu0 0
    %846 = vmatprep.subr.bf16.mxu0 0
    %847 = vmatpush1.bf16.msra.mxu0 0
    %848 = vmatprep.subr.bf16.mxu0 0
    %849 = vmatpush1.bf16.msra.mxu0 0
    %850 = vmatprep.subr.bf16.mxu0 0
    %851 = vmatpush1.bf16.msra.mxu0 0
    %852 = vmatprep.subr.bf16.mxu0 0
    %853 = vmatpush1.bf16.msra.mxu0 0
    %854 = vmatprep.subr.bf16.mxu0 0
    %855 = vmatpush1.bf16.msra.mxu0 0
    %856 = vmatprep.subr.bf16.mxu0 0
    %857 = vmatpush1.bf16.msra.mxu0 0
    %858 = vmatprep.subr.bf16.mxu0 0
    %859 = vmatpush1.bf16.msra.mxu0 0
    %860 = vmatprep.subr.bf16.mxu0 0
    %861 = vmatpush1.bf16.msra.mxu0 0
    %862 = vmatprep.subr.bf16.mxu0 0
    %863 = vmatpush1.bf16.msra.mxu0 0
    %864 = vmatprep.mubr.bf16.mxu0 0
    %865 = vmatmul.mubr.bf16.gmra.mrb[0].mxu0 %v830
    %v866 = vpop.f32.mrb[0].mxu0
    %v867 = vadd.f32 %v811, %v866
    %v868 = vpop.f32.mrb[0].mxu0
    %v869 = vpop.f32.mrb[0].mxu0
    %v870 = vpop.f32.mrb[0].mxu0
    %871 = vdwg.mxu0
    %s872 = scalar_lea.vmem [#allocation7], 16
    %873 = vst [vmem:[%s872 + $0x4] sm:$0xf] %v867
    %v874 = vld [vmem:[#allocation4 + $0x10] sm:$0xf]
    %v875 = vld [vmem:[#allocation4 + $0x18] sm:$0xf]
    %878 = vrot.lane.b32.xlu0 %v874, 119
    %v879 = vpop.permute.xlu0 %878
    %880 = vrot.lane.b32.xlu0 %v875, 119
    %v881 = vpop.permute.xlu0 %880
    %v882 = vsel %vm570, %v879, %v881
    %884 = vst [vmem:[%s872] sm:$0xf] %v882
    %v885 = vsel %vm574, %v867, 0.0
    %886 = vadd.xlane.f32.xlu0 %v885
    %v887 = vpop.xlane.xlu0 %886
    %v888 = vadd.f32 %v733, %v887
    %890 = vrot.lane.b32.xlu0 %v867, 64
    %v891 = vpop.permute.xlu0 %890
    %v893 = vsel %vm574, %v891, 0.0
    %894 = vadd.xlane.f32.xlu0 %v893
    %v895 = vpop.xlane.xlu0 %894
    %v896 = vadd.f32 %v741, %v895
    %v897 = vld [vmem:[#allocation3] sm:$0xff]
    %v898 = vsel %vm601, %v897, 0
    %v899 = vsel %vm756, %v897, 0
    %900 = vrot.lane.b32.xlu0 %v111, 18
    %v901 = vpop.permute.xlu0 %900
    %v902 = vrot.slane %v901, 4
    %vm903 = vcmask 146432
    %v904 = vsel %vm903, %v902, %v901
    %vm905 = vcmp.ne.s16.totalorder %v904, 0
    %v906 = vsel %vm905, %v897, 0
    %v908 = vunpack.c.l.b16 %v897
    %v909 = vunpack.c.h.b16 %v897
    %v910 = vpack.c.b16 %v908, %v908
    %v911 = vpack.c.b16 %v909, %v909
    %v913 = vunpack.c.l.b16 %v898
    %v914 = vunpack.c.h.b16 %v898
    %v915 = vpack.c.b16 %v913, %v913
    %v916 = vpack.c.b16 %v914, %v914
    %917 = vrot.lane.b32.xlu0 %v915, 127
    %v918 = vpop.permute.xlu0 %917
    %919 = vrot.lane.b32.xlu0 %v916, 127
    %v920 = vpop.permute.xlu0 %919
    %v921 = vsel %vm199, %v918, %v920
    %v923 = vunpack.c.l.b16 %v899
    %v924 = vunpack.c.h.b16 %v899
    %v925 = vpack.c.b16 %v923, %v923
    %v926 = vpack.c.b16 %v924, %v924
    %927 = vrot.lane.b32.xlu0 %v925, 120
    %v928 = vpop.permute.xlu0 %927
    %929 = vrot.lane.b32.xlu0 %v926, 120
    %v930 = vpop.permute.xlu0 %929
    %v931 = vsel %vm209, %v928, %v930
    %v933 = vunpack.c.l.b16 %v906
    %v934 = vunpack.c.h.b16 %v906
    %v935 = vpack.c.b16 %v933, %v933
    %v936 = vpack.c.b16 %v934, %v934
    %937 = vrot.lane.b32.xlu0 %v935, 119
    %v938 = vpop.permute.xlu0 %937
    %939 = vrot.lane.b32.xlu0 %v936, 119
    %v940 = vpop.permute.xlu0 %939
    %v941 = vsel %vm219, %v938, %v940
    %v944 = vsel %vm308, %v910, %v921
    %v947 = vsel %vm308, %v911, %v920
    %v950 = vsel %vm308, %v931, %v941
    %v953 = vsel %vm308, %v930, %v940
    %s954 = scalar_lea.vmem %s3, 6
    %v955 = vld [vmem:[%s954] sm:$0x3]
    %v956 = vld [vmem:[%s4] sm:$0xf]
    %958 = vset.pattern.permute.xlu0 0
    %959 = vperm.xlu0 %958, %v956
    %v960 = vpop.permute.xlu0 %959
    %966 = vrot.lane.b32.xlu0 %v944, 119
    %v967 = vpop.permute.xlu0 %966
    %968 = vrot.lane.b32.xlu0 %v947, 119
    %v969 = vpop.permute.xlu0 %968
    %970 = vrot.lane.b32.xlu0 %v950, 119
    %v971 = vpop.permute.xlu0 %970
    %972 = vrot.lane.b32.xlu0 %v953, 119
    %v973 = vpop.permute.xlu0 %972
    %v974 = vsel %vm219, %v967, %v969
    %v975 = vsel %vm219, %v971, %v973
    %v979 = vsel %vm517, %v955, 0
    %981 = vmatprep.subr.bf16.mxu0 0
    %982 = vmatpush1.bf16.msra.mxu0 %v974
    %983 = vmatprep.subr.bf16.mxu0 0
    %984 = vmatpush1.bf16.msra.mxu0 %v975
    %985 = vmatprep.subr.bf16.mxu0 0
    %986 = vmatpush1.bf16.msra.mxu0 0
    %987 = vmatprep.subr.bf16.mxu0 0
    %988 = vmatpush1.bf16.msra.mxu0 0
    %989 = vmatprep.subr.bf16.mxu0 0
    %990 = vmatpush1.bf16.msra.mxu0 0
    %991 = vmatprep.subr.bf16.mxu0 0
    %992 = vmatpush1.bf16.msra.mxu0 0
    %993 = vmatprep.subr.bf16.mxu0 0
    %994 = vmatpush1.bf16.msra.mxu0 0
    %995 = vmatprep.subr.bf16.mxu0 0
    %996 = vmatpush1.bf16.msra.mxu0 0
    %997 = vmatprep.subr.bf16.mxu0 0
    %998 = vmatpush1.bf16.msra.mxu0 0
    %999 = vmatprep.subr.bf16.mxu0 0
    %1000 = vmatpush1.bf16.msra.mxu0 0
    %1001 = vmatprep.subr.bf16.mxu0 0
    %1002 = vmatpush1.bf16.msra.mxu0 0
    %1003 = vmatprep.subr.bf16.mxu0 0
    %1004 = vmatpush1.bf16.msra.mxu0 0
    %1005 = vmatprep.subr.bf16.mxu0 0
    %1006 = vmatpush1.bf16.msra.mxu0 0
    %1007 = vmatprep.subr.bf16.mxu0 0
    %1008 = vmatpush1.bf16.msra.mxu0 0
    %1009 = vmatprep.subr.bf16.mxu0 0
    %1010 = vmatpush1.bf16.msra.mxu0 0
    %1011 = vmatprep.subr.bf16.mxu0 0
    %1012 = vmatpush1.bf16.msra.mxu0 0
    %1013 = vmatprep.mubr.bf16.mxu0 0
    %1014 = vmatmul.mubr.bf16.gmra.mrb[0].mxu0 %v979
    %v1015 = vpop.f32.mrb[0].mxu0
    %v1016 = vadd.f32 %v960, %v1015
    %v1017 = vpop.f32.mrb[0].mxu0
    %v1018 = vpop.f32.mrb[0].mxu0
    %v1019 = vpop.f32.mrb[0].mxu0
    %1020 = vdwg.mxu0
    %s1021 = scalar_lea.vmem [#allocation7], 24
    %1022 = vst [vmem:[%s1021 + $0x4] sm:$0xf] %v1016
    %v1023 = vld [vmem:[#allocation4 + $0x10] sm:$0xf0]
    %v1024 = vld [vmem:[#allocation4 + $0x18] sm:$0xf0]
    %1027 = vrot.lane.b32.xlu0 %v1023, 119
    %v1028 = vpop.permute.xlu0 %1027
    %1029 = vrot.lane.b32.xlu0 %v1024, 119
    %v1030 = vpop.permute.xlu0 %1029
    %v1031 = vsel %vm570, %v1028, %v1030
    %1033 = vst [vmem:[%s1021 - $0x4] sm:$0xf0] %v1031
    %v1034 = vsel %vm574, %v1016, 0.0
    %1035 = vadd.xlane.f32.xlu0 %v1034
    %v1036 = vpop.xlane.xlu0 %1035
    %v1037 = vadd.f32 %v888, %v1036
    %1039 = vrot.lane.b32.xlu0 %v1016, 64
    %v1040 = vpop.permute.xlu0 %1039
    %v1042 = vsel %vm574, %v1040, 0.0
    %1043 = vadd.xlane.f32.xlu0 %v1042
    %v1044 = vpop.xlane.xlu0 %1043
    %v1045 = vadd.f32 %v896, %v1044
    %v1046 = vmul.f32 %v1037, 0.00390625
    %v1047 = vmul.f32 %v1045, 0.00390625
    %v1048 = vld [vmem:[#allocation7 + $0x4] sm:$0xf]
    %v1049 = vsub.f32 %v1048, %v1046
    %v1050 = vmul.f32 %v1049, %v1049
    %v1051 = vsel %vm574, %v1050, 0.0
    %1052 = vadd.xlane.f32.xlu0 %v1051
    %v1053 = vpop.xlane.xlu0 %1052
    %v1054 = vadd.f32 %v1053, 0.0
    %v1055 = vsub.f32 %v1048, %v1047
    %v1056 = vmul.f32 %v1055, %v1055
    %1058 = vrot.lane.b32.xlu0 %v1056, 64
    %v1059 = vpop.permute.xlu0 %1058
    %v1061 = vsel %vm574, %v1059, 0.0
    %1062 = vadd.xlane.f32.xlu0 %v1061
    %v1063 = vpop.xlane.xlu0 %1062
    %v1064 = vadd.f32 %v1063, 0.0
    %v1065 = vld [vmem:[%s717 + $0x4] sm:$0xf]
    %v1066 = vsub.f32 %v1065, %v1046
    %v1067 = vmul.f32 %v1066, %v1066
    %v1068 = vsel %vm574, %v1067, 0.0
    %1069 = vadd.xlane.f32.xlu0 %v1068
    %v1070 = vpop.xlane.xlu0 %1069
    %v1071 = vadd.f32 %v1054, %v1070
    %v1072 = vsub.f32 %v1065, %v1047
    %v1073 = vmul.f32 %v1072, %v1072
    %1075 = vrot.lane.b32.xlu0 %v1073, 64
    %v1076 = vpop.permute.xlu0 %1075
    %v1078 = vsel %vm574, %v1076, 0.0
    %1079 = vadd.xlane.f32.xlu0 %v1078
    %v1080 = vpop.xlane.xlu0 %1079
    %v1081 = vadd.f32 %v1064, %v1080
    %v1082 = vld [vmem:[%s872 + $0x4] sm:$0xf]
    %v1083 = vsub.f32 %v1082, %v1046
    %v1084 = vmul.f32 %v1083, %v1083
    %v1085 = vsel %vm574, %v1084, 0.0
    %1086 = vadd.xlane.f32.xlu0 %v1085
    %v1087 = vpop.xlane.xlu0 %1086
    %v1088 = vadd.f32 %v1071, %v1087
    %v1089 = vsub.f32 %v1082, %v1047
    %v1090 = vmul.f32 %v1089, %v1089
    %1092 = vrot.lane.b32.xlu0 %v1090, 64
    %v1093 = vpop.permute.xlu0 %1092
    %v1095 = vsel %vm574, %v1093, 0.0
    %1096 = vadd.xlane.f32.xlu0 %v1095
    %v1097 = vpop.xlane.xlu0 %1096
    %v1098 = vadd.f32 %v1081, %v1097
    %v1099 = vld [vmem:[%s1021 + $0x4] sm:$0xf]
    %v1100 = vsub.f32 %v1099, %v1046
    %v1101 = vmul.f32 %v1100, %v1100
    %v1102 = vsel %vm574, %v1101, 0.0
    %1103 = vadd.xlane.f32.xlu0 %v1102
    %v1104 = vpop.xlane.xlu0 %1103
    %v1105 = vadd.f32 %v1088, %v1104
    %v1106 = vsub.f32 %v1099, %v1047
    %v1107 = vmul.f32 %v1106, %v1106
    %1109 = vrot.lane.b32.xlu0 %v1107, 64
    %v1110 = vpop.permute.xlu0 %1109
    %v1112 = vsel %vm574, %v1110, 0.0
    %1113 = vadd.xlane.f32.xlu0 %v1112
    %v1114 = vpop.xlane.xlu0 %1113
    %v1115 = vadd.f32 %v1098, %v1114
    %v1116 = vmul.f32 %v1105, 0.00390625
    %v1117 = vadd.f32 %v1116, 1e-05
    %v1118 = vrsqrt.pop %v1117
    %v1119 = vmul.f32 %v1115, 0.00390625
    %v1120 = vadd.f32 %v1119, 1e-05
    %v1121 = vrsqrt.pop %v1120
    %v1122 = vsel %vm398, %v1046, %v1047
    %v1123 = vsel %vm398, %v1118, %v1121
    %v1124 = vsub.f32 %v1048, %v1122
    %v1125 = vmul.f32 %v1124, %v1123
    %1126 = vst [vmem:[#allocation7 + $0x4] sm:$0xf] %v1125
    %v1127 = vld [vmem:[%s717 + $0x4] sm:$0xf]
    %v1128 = vsub.f32 %v1127, %v1122
    %v1129 = vmul.f32 %v1128, %v1123
    %1130 = vst [vmem:[%s717 + $0x4] sm:$0xf] %v1129
    %v1131 = vld [vmem:[%s872 + $0x4] sm:$0xf]
    %v1132 = vsub.f32 %v1131, %v1122
    %v1133 = vmul.f32 %v1132, %v1123
    %1134 = vst [vmem:[%s872 + $0x4] sm:$0xf] %v1133
    %v1135 = vld [vmem:[%s1021 + $0x4] sm:$0xf]
    %v1136 = vsub.f32 %v1135, %v1122
    %v1137 = vmul.f32 %v1136, %v1123
    %1138 = vst [vmem:[%s1021 + $0x4] sm:$0xf] %v1137
    // Predicated region
    $region30: #{tpu_custom_call.1} parent=1 // pred_check
      _
    $region31: #{tpu_custom_call.1} parent=1 // pred_check_branch
      %1140 = sbr.rel (0) target = $region33
    $region32: #{tpu_custom_call.1} parent=1 // pred_region
      %s1142 = ssub.s32 512, 512
      %1143 = vsyncadd [#allocation6], %s1142
      %s1144 = sshll.u32 [#allocation7], 4
      %s1145 = int_to_ptr.vmem [resolvable:$true] %s1144
      %1150 = dma.vmem_to_hbm [thread:$0]  %s1145, 512, %s5, [#allocation6], 128, 128, 8
    $region33: #{tpu_custom_call.1} parent=1 // pred_fallthru
      _
    // Predicated region
    $region34: #{tpu_custom_call.1} parent=1 // pred_check
      _
    $region35: #{tpu_custom_call.1} parent=1 // pred_check_branch
      %1152 = sbr.rel (0) target = $region37
    $region36: #{tpu_custom_call.1} parent=1 // pred_region
      %1153 = dma.done [#allocation6], 512
    $region37: #{tpu_custom_call.1} parent=1 // pred_fallthru
      _
    %1154 = vsyncpa [#allocation5], 1
    %1155 = vsyncpa [#allocation6], 1

</llo_original>
